<compile_context>
chip_gen: v7x
topology: tpu7x:2x2x1
jax: 0.10.0
libtpu: 0.0.40
codegen_flags: <defaults>
</compile_context>

<pallas_src>
import functools
import math

import jax
import jax.numpy as jnp
from jax import lax
from jax.experimental import pallas as pl
from jax.experimental.pallas import tpu as pltpu


def _pow_int(x, p):
    """x**p via square-and-multiply for small non-negative integer p
    (alpha=1.0 -> 0 muls, beta=6.0 -> 3 muls); falls back to jnp.power otherwise."""
    pf = float(p)
    if pf.is_integer() and 0 <= pf <= 64:
        n = int(pf)
        if n == 0:
            return jnp.ones_like(x)
        result = None
        base = x
        while True:
            if n & 1:
                result = base if result is None else result * base
            n >>= 1
            if n == 0:
                break
            base = base * base
        return result
    return jnp.power(x, p)


def _box_metrics(pd_scores, pd_aux, anc, gt, *, alpha, beta, approx, anchor_offset, na_real):
    """Per-tile pairwise metrics.

    pd_scores (C, T), pd_aux (5, T)=[x1,y1,x2,y2,atan(w/h)], anc (2, T),
    gt (G, 7)=[x1,y1,x2,y2,label,atan(w/h),mask].
    Returns keys, align_metric, overlaps, mask_valid, all (G, T).
    """
    f32 = jnp.float32
    C, T = pd_scores.shape

    def _div(num, den):
        if approx:
            return num * pl.reciprocal(den, approx=True)   # EUP slot, VALU stays free
        return num / den

    ax, ay = anc[0:1, :], anc[1:2, :]
    px1, py1 = pd_aux[0:1, :], pd_aux[1:2, :]
    px2, py2 = pd_aux[2:3, :], pd_aux[3:4, :]
    atan_pd = pd_aux[4:5, :]

    gx1, gy1 = gt[:, 0:1], gt[:, 1:2]
    gx2, gy2 = gt[:, 2:3], gt[:, 3:4]
    gt_label = gt[:, 4:5]
    atan_gt = gt[:, 5:6]
    mask_gt = gt[:, 6:7]

    lane = lax.broadcasted_iota(jnp.int32, (1, T), 1)
    gidx = lane + anchor_offset                     # global anchor index
    lane_ok = gidx < na_real                        # padded anchor lanes are never candidates

    # select_candidates_in_gts (reference uses its own hard-coded eps=1e-9, NOT self.eps)
    in_gts_eps = 1e-9
    deltas_min = jnp.minimum(jnp.minimum(ax - gx1, ay - gy1),
                             jnp.minimum(gx2 - ax, gy2 - ay))                # (G, T)
    mask_in_gts = ((deltas_min > in_gts_eps) & lane_ok).astype(f32)
    mask_valid = mask_in_gts * mask_gt
    valid = mask_valid > 0.0

    # class-score gather pd_scores[:, gt_labels[g]] via one-hot matmul on the MXU
    cls_iota = lax.broadcasted_iota(jnp.int32, (1, C), 1)
    onehot_cls = (cls_iota == gt_label.astype(jnp.int32)).astype(f32)        # (G, C)
    bbox_scores = jnp.dot(onehot_cls, pd_scores, preferred_element_type=f32)  # (G, T)
    bbox_scores = jnp.where(valid, bbox_scores, 0.0)

    # pairwise CIoU(gt, pred)
    ciou_eps = 1e-7
    w1, h1 = gx2 - gx1, gy2 - gy1
    w2, h2 = px2 - px1, py2 - py1
    inter = (jnp.maximum(jnp.minimum(gx2, px2) - jnp.maximum(gx1, px1), 0.0) *
             jnp.maximum(jnp.minimum(gy2, py2) - jnp.maximum(gy1, py1), 0.0))
    union = w1 * h1 + w2 * h2 - inter + ciou_eps
    iou = _div(inter, union)
    cw = jnp.maximum(gx2, px2) - jnp.minimum(gx1, px1)
    ch = jnp.maximum(gy2, py2) - jnp.minimum(gy1, py1)
    c2 = cw * cw + ch * ch + ciou_eps
    dx = px1 + px2 - gx1 - gx2
    dy = py1 + py2 - gy1 - gy2
    rho2 = (dx * dx + dy * dy) * 0.25
    dt = atan_pd - atan_gt
    v = (4.0 / (math.pi ** 2)) * dt * dt
    alpha_ciou = _div(v, v - iou + (1.0 + ciou_eps))
    ciou = iou - (_div(rho2, c2) + v * alpha_ciou)
    overlaps = jnp.where(valid, jnp.maximum(ciou, 0.0), 0.0)                  # (G, T)

    align_metric = _pow_int(bbox_scores, alpha) * _pow_int(overlaps, beta)

    # Non-positive metrics get a strictly-decreasing-in-global-index negative sentinel so
    # zero-metric ties resolve lowest-index-first with a single max/threshold compare.
    sentinel = -(gidx.astype(f32) + 1.0) * 1e-30
    keys = jnp.where(align_metric > 0.0, align_metric, sentinel)
    return keys, align_metric, overlaps, mask_valid


def _thresh_kernel(pd_scores_ref, pd_aux_ref, anc_ref, gt_ref, thr_ref, top_scr,
                   *, topk, alpha, beta, approx, na_tile, na_real):
    """Pass 1: running per-gt top-k (distinct) metric keys across anchor tiles."""
    t = pl.program_id(1)
    keys, _, _, _ = _box_metrics(
        pd_scores_ref[...], pd_aux_ref[...], anc_ref[...], gt_ref[...],
        alpha=alpha, beta=beta, approx=approx,
        anchor_offset=t * na_tile, na_real=na_real)

    @pl.when(t == 0)
    def _():
        top_scr[...] = jnp.full(top_scr.shape, -jnp.inf, dtype=top_scr.dtype)

    old = top_scr[...]                        # (G, topk) running top-k distinct keys
    work = keys                               # (G, NA_T)
    m = None
    for i in range(topk):
        m = jnp.maximum(jnp.max(work, axis=-1, keepdims=True),
                        jnp.max(old, axis=-1, keepdims=True))        # (G, 1)
        top_scr[:, i:i + 1] = m
        if i + 1 < topk:
            work = jnp.where(work == m, -jnp.inf, work)
            old = jnp.where(old == m, -jnp.inf, old)
    thr_ref[...] = m                          # k-th largest distinct key so far (final at last tile)


def _assign_kernel(*refs, topk, alpha, beta, approx, single_pass, na_tile, na_real):
    """Pass 2: per-tile selection, dedup, targets (fused MXU gather) and norm partials."""
    if single_pass:
        (pd_scores_ref, pd_aux_ref, anc_ref, gt_ref, lhs_ref,
         packed_ref, tgi_ref, fg_ref, aln_ref, part_ref) = refs
        thr_ref = None
    else:
        (pd_scores_ref, pd_aux_ref, anc_ref, gt_ref, lhs_ref, thr_ref,
         packed_ref, tgi_ref, fg_ref, aln_ref, part_ref) = refs

    f32 = jnp.float32
    t = pl.program_id(1)
    keys, align_metric, overlaps, mask_valid = _box_metrics(
        pd_scores_ref[...], pd_aux_ref[...], anc_ref[...], gt_ref[...],
        alpha=alpha, beta=beta, approx=approx,
        anchor_offset=t * na_tile, na_real=na_real)
    G = mask_valid.shape[0]

    if single_pass:
        # single tile: compute the k-th-largest-distinct threshold locally
        work = keys
        thr = None
        for i in range(topk):
            thr = jnp.max(work, axis=-1, keepdims=True)
            if i + 1 < topk:
                work = jnp.where(work == thr, -jnp.inf, work)
    else:
        thr = thr_ref[...]                                            # (G, 1)

    # select_topk_candidates via global threshold (ties at the threshold all picked,
    # matching the previous accepted behavior)
    mask_pos = jnp.where(keys >= thr, mask_valid, 0.0)                # (G, T)
    fg_cnt = jnp.sum(mask_pos, axis=0, keepdims=True)                 # (1, T)

    # select_highest_overlaps: per-anchor dedup (tile-local across G)
    gt_iota = lax.broadcasted_iota(jnp.int32, (G, 1), 0)
    max_ov = jnp.max(overlaps, axis=0, keepdims=True)
    max_ov_idx = jnp.min(jnp.where(overlaps == max_ov, gt_iota, G),
                         axis=0, keepdims=True)                        # first argmax over G
    is_max_ov = (gt_iota == max_ov_idx).astype(f32)
    mask_pos = jnp.where(fg_cnt > 1.0, is_max_ov, mask_pos)

    fg_bool = fg_cnt > 0.0                                             # fg_final == (fg_init > 0)
    tgi = jnp.sum(gt_iota.astype(f32) * mask_pos,
                  axis=0, keepdims=True).astype(jnp.int32)             # (1, T), exact
    onehot_t = (gt_iota == tgi).astype(f32)                            # (G, T)

    # get_targets: single MXU contraction (boxes, label, class one-hot in one shot)
    packed_ref[...] = jnp.dot(lhs_ref[...], onehot_t, preferred_element_type=f32)  # (5+C, T)
    tgi_ref[...] = tgi
    fg_ref[...] = fg_bool.astype(jnp.int32)

    # normalization partials (global per-gt maxima finished in the wrapper)
    align_pos = align_metric * mask_pos
    aln_ref[...] = jnp.max(align_pos, axis=0, keepdims=True)           # metric at assigned gt
    part_ref[:, 0:1] = jnp.max(align_pos, axis=-1, keepdims=True)      # per-gt align max (tile)
    part_ref[:, 1:2] = jnp.max(overlaps * mask_pos, axis=-1, keepdims=True)


def _round_up(x, m):
    return ((x + m - 1) // m) * m


def _pick_anchor_tile(na, na_tile):
    """na_pad = round_up(na, 128); NA_T = largest multiple of 128 dividing na_pad, <= na_tile."""
    na_pad = _round_up(max(na, 128), 128)
    m = na_pad // 128
    cap = max(1, max(na_tile, 128) // 128)
    d = 1
    for cand in range(1, m + 1):
        if m % cand == 0 and cand <= cap:
            d = cand
    return na_pad, 128 * d


def task_aligned_assigner(pd_scores, pd_bboxes, anc_points, gt_labels, gt_bboxes, mask_gt,
                          topk=13, num_classes=80, alpha=1.0, beta=6.0, eps=1e-9,
                          na_tile=1024, approx_reciprocal=True):
    """JAX/Pallas equivalent of TaskAlignedAssigner.forward.

    Returns (target_labels, target_bboxes, target_scores, fg_mask, target_gt_idx)
    with int32 index dtypes (PyTorch uses int64) and float32 scores/boxes.
    `na_tile` controls the anchor-tile size (raise to 4096 on v6e/v5e, keep 1024-2048 on v7x);
    `approx_reciprocal=False` uses exact f32 division for bit-faithful CIoU.
    """
    f32 = jnp.float32
    bs, na, C = pd_scores.shape
    G = gt_bboxes.shape[1]
    assert C == num_classes

    if G == 0:
        return (jnp.full((bs, na), num_classes, jnp.int32),
                jnp.zeros((bs, na, 4), f32),
                jnp.zeros((bs, na, C), f32),
                jnp.zeros((bs, na), bool),
                jnp.zeros((bs, na), jnp.int32))

    ciou_eps = 1e-7
    pd_scores = pd_scores.astype(f32)
    pd_bboxes = pd_bboxes.astype(f32)
    gt_bboxes = gt_bboxes.astype(f32)
    gt_labels_f = gt_labels.astype(f32).reshape(bs, G, 1)
    mask_gt_f = mask_gt.astype(f32).reshape(bs, G, 1)

    # TODO(synk): jnp.arctan(w/h) precomputed per box (O(na+G) glue) because a Mosaic
    # lowering for atan is not guaranteed; the O(bs*G*na) CIoU hot path stays in-kernel.
    pw = pd_bboxes[..., 2] - pd_bboxes[..., 0]
    ph = pd_bboxes[..., 3] - pd_bboxes[..., 1]
    gw = gt_bboxes[..., 2] - gt_bboxes[..., 0]
    gh = gt_bboxes[..., 3] - gt_bboxes[..., 1]
    atan_pd = jnp.arctan(pw / (ph + ciou_eps))                             # (bs, na)
    atan_gt = jnp.arctan(gw / (gh + ciou_eps))                             # (bs, G)

    # lane-dense channel-major layouts: anchors (na) on the lane dimension
    pd_scores_t = jnp.transpose(pd_scores, (0, 2, 1))                      # (bs, C, na)
    pd_aux_t = jnp.concatenate([jnp.transpose(pd_bboxes, (0, 2, 1)),
                                atan_pd[:, None, :]], axis=1)              # (bs, 5, na)
    anc_t = jnp.transpose(anc_points.astype(f32), (1, 0))                  # (2, na)
    gt_aux = jnp.concatenate([gt_bboxes, gt_labels_f,
                              atan_gt[..., None], mask_gt_f], axis=-1)     # (bs, G, 7)

    # fused get_targets LHS (lane-dense over G): rows 0..3 boxes, 4 label, 5..4+C one-hot(label)
    gt_box_label_t = jnp.transpose(jnp.concatenate([gt_bboxes, gt_labels_f], axis=-1),
                                   (0, 2, 1))                              # (bs, 5, G)
    onehot_cls_t = (gt_labels_f.reshape(bs, 1, G).astype(jnp.int32) ==
                    jnp.arange(C, dtype=jnp.int32)[None, :, None]).astype(f32)   # (bs, C, G)
    lhs = jnp.concatenate([gt_box_label_t, onehot_cls_t], axis=1)          # (bs, 5+C, G)

    # anchor tiling (pad na to a multiple of 128; padded lanes masked out in-kernel)
    na_pad, NA_T = _pick_anchor_tile(na, na_tile)
    n_tiles = na_pad // NA_T
    single_pass = n_tiles == 1
    if na_pad != na:
        pad = na_pad - na
        pd_scores_t = jnp.pad(pd_scores_t, ((0, 0), (0, 0), (0, pad)))
        pd_aux_t = jnp.pad(pd_aux_t, ((0, 0), (0, 0), (0, pad)))
        anc_t = jnp.pad(anc_t, ((0, 0), (0, pad)))

    grid = (bs, n_tiles)
    pd_spec = pl.BlockSpec((None, C, NA_T), lambda b, t: (b, 0, t))
    aux_spec = pl.BlockSpec((None, 5, NA_T), lambda b, t: (b, 0, t))
    anc_spec = pl.BlockSpec((2, NA_T), lambda b, t: (0, t))
    gt_spec = pl.BlockSpec((None, G, 7), lambda b, t: (b, 0, 0))
    lhs_spec = pl.BlockSpec((None, 5 + C, G), lambda b, t: (b, 0, 0))
    thr_spec = pl.BlockSpec((None, G, 1), lambda b, t: (b, 0, 0))

    def cparams(sem):
        # working set is a handful of (G, NA_T) f32 planes; default NA_T keeps it well
        # under this limit on v5e/v6e/v7x.
        return pltpu.CompilerParams(dimension_semantics=sem,
                                    vmem_limit_bytes=48 * 1024 * 1024)

    thr = None
    if not single_pass:
        thr = pl.pallas_call(
            functools.partial(_thresh_kernel, topk=topk, alpha=alpha, beta=beta,
                              approx=approx_reciprocal, na_tile=NA_T, na_real=na),
            out_shape=jax.ShapeDtypeStruct((bs, G, 1), f32),
            grid=grid,
            in_specs=[pd_spec, aux_spec, anc_spec, gt_spec],
            out_specs=thr_spec,
            scratch_shapes=[pltpu.VMEM((G, topk), f32)],
            compiler_params=cparams(("parallel", "arbitrary")),
        )(pd_scores_t, pd_aux_t, anc_t, gt_aux)

    out_shape = (
        jax.ShapeDtypeStruct((bs, 5 + C, na_pad), f32),     # packed: boxes, label, class one-hot
        jax.ShapeDtypeStruct((bs, 1, na_pad), jnp.int32),   # target_gt_idx
        jax.ShapeDtypeStruct((bs, 1, na_pad), jnp.int32),   # fg mask (0/1)
        jax.ShapeDtypeStruct((bs, 1, na_pad), f32),         # align metric at assigned gt
        jax.ShapeDtypeStruct((bs, n_tiles, G, 2), f32),     # per-tile per-gt [align, overlap] maxima
    )
    out_specs = (
        pl.BlockSpec((None, 5 + C, NA_T), lambda b, t: (b, 0, t)),
        pl.BlockSpec((None, 1, NA_T), lambda b, t: (b, 0, t)),
        pl.BlockSpec((None, 1, NA_T), lambda b, t: (b, 0, t)),
        pl.BlockSpec((None, 1, NA_T), lambda b, t: (b, 0, t)),
        pl.BlockSpec((None, None, G, 2), lambda b, t: (b, t, 0, 0)),
    )
    in_specs = [pd_spec, aux_spec, anc_spec, gt_spec, lhs_spec]
    operands = [pd_scores_t, pd_aux_t, anc_t, gt_aux, lhs]
    if not single_pass:
        in_specs.append(thr_spec)
        operands.append(thr)

    packed, tgi_o, fg_o, aln_o, part_o = pl.pallas_call(
        functools.partial(_assign_kernel, topk=topk, alpha=alpha, beta=beta,
                          approx=approx_reciprocal, single_pass=single_pass,
                          na_tile=NA_T, na_real=na),
        out_shape=out_shape,
        grid=grid,
        in_specs=in_specs,
        out_specs=out_specs,
        compiler_params=cparams(("parallel", "parallel")),
    )(*operands)

    # ---- score normalization + unpack (O(bs*na*C) XLA glue) ----
    pos = jnp.max(part_o, axis=1)                                  # (bs, G, 2) global per-gt maxima
    ratio = pos[..., 1] / (pos[..., 0] + eps)                      # pos_overlaps / (pos_align + eps)
    tgi = tgi_o[:, 0, :na]                                         # (bs, na)
    aln = aln_o[:, 0, :na]
    norm = aln * jnp.take_along_axis(ratio, tgi, axis=1)           # 0 for non-fg anchors

    packed = packed[:, :, :na]
    target_bboxes = jnp.transpose(packed[:, 0:4, :], (0, 2, 1))    # (bs, na, 4)
    target_labels = jnp.maximum(packed[:, 4, :], 0.0).astype(jnp.int32)
    target_scores = jnp.transpose(packed[:, 5:, :] * norm[:, None, :], (0, 2, 1))  # (bs, na, C)
    fg_mask = fg_o[:, 0, :na].astype(bool)
    return target_labels, target_bboxes, target_scores, fg_mask, tgi


if __name__ == "__main__":
    key = jax.random.PRNGKey(0)
    bs, H, W, C, G = 2, 16, 16, 16, 8
    na = H * W
    topk = 13
    stride = 8.0

    k1, k2, k3, k4, k5, k6 = jax.random.split(key, 6)

    ys, xs = jnp.meshgrid(jnp.arange(H, dtype=jnp.float32),
                          jnp.arange(W, dtype=jnp.float32), indexing='ij')
    anc_points = jnp.stack([(xs.reshape(-1) + 0.5) * stride,
                            (ys.reshape(-1) + 0.5) * stride], axis=-1)     # (na, 2)

    pd_scores = jax.nn.sigmoid(jax.random.normal(k1, (bs, na, C), jnp.float32))
    ctr = anc_points[None] + 4.0 * jax.random.normal(k2, (bs, na, 2), jnp.float32)
    wh = 8.0 + 24.0 * jax.random.uniform(k3, (bs, na, 2), jnp.float32)
    pd_bboxes = jnp.concatenate([ctr - wh / 2.0, ctr + wh / 2.0], axis=-1)

    gctr = jax.random.uniform(k4, (bs, G, 2), jnp.float32, 16.0, 112.0)
    gwh = jax.random.uniform(k5, (bs, G, 2), jnp.float32, 16.0, 64.0)
    gt_bboxes = jnp.concatenate([gctr - gwh / 2.0, gctr + gwh / 2.0], axis=-1)
    gt_labels = jax.random.randint(k6, (bs, G, 1), 0, C, jnp.int32)
    n_valid = jnp.array([6, 4], jnp.int32).reshape(bs, 1, 1)
    mask_gt = (jnp.arange(G).reshape(1, G, 1) < n_valid).astype(jnp.float32)

    # default path (single anchor tile -> fused in-kernel threshold)
    out1 = jax.block_until_ready(task_aligned_assigner(
        pd_scores, pd_bboxes, anc_points, gt_labels, gt_bboxes, mask_gt,
        topk=topk, num_classes=C))
    # force the two-pass anchor-tiled path (na=256 -> two 128-lane tiles)
    out2 = jax.block_until_ready(task_aligned_assigner(
        pd_scores, pd_bboxes, anc_points, gt_labels, gt_bboxes, mask_gt,
        topk=topk, num_classes=C, na_tile=128))

    tl, tb, ts, fg, tgi = out1
    assert tl.shape == (bs, na) and tb.shape == (bs, na, 4)
    assert ts.shape == (bs, na, C) and fg.shape == (bs, na) and tgi.shape == (bs, na)
    assert fg.dtype == jnp.bool_
    # the tiled two-pass and single-tile paths must agree
    for a, b in zip(out1, out2):
        if jnp.issubdtype(a.dtype, jnp.floating):
            assert jnp.allclose(a, b, rtol=1e-6, atol=1e-6), "tiled/single-tile mismatch"
        else:
            assert bool(jnp.all(a == b)), "tiled/single-tile mismatch"
    print("KERNEL_OK")
</pallas_src>

<mosaic_0001>
module attributes {stable_mosaic.version = 11 : i64} {
  func.func @_assign_kernel(%arg0: i32, %arg1: i32, %arg2: memref<1x16x256xf32, #tpu.memory_space<vmem>>, %arg3: memref<1x5x256xf32, #tpu.memory_space<vmem>>, %arg4: memref<2x256xf32, #tpu.memory_space<vmem>>, %arg5: memref<1x8x7xf32, #tpu.memory_space<vmem>>, %arg6: memref<1x21x8xf32, #tpu.memory_space<vmem>>, %arg7: memref<1x21x256xf32, #tpu.memory_space<vmem>>, %arg8: memref<1x1x256xi32, #tpu.memory_space<vmem>>, %arg9: memref<1x1x256xi32, #tpu.memory_space<vmem>>, %arg10: memref<1x1x256xf32, #tpu.memory_space<vmem>>, %arg11: memref<1x1x8x2xf32, #tpu.memory_space<vmem>>) attributes {dimension_semantics = [#tpu.dimension_semantics<parallel>, #tpu.dimension_semantics<parallel>], iteration_bounds = array<i64: 2, 1>, scalar_prefetch = 0 : i64, scratch_operands = 0 : i64, tpu.core_type = #tpu.core_type<tc>, window_params = [{transform_indices = @transform_0, window_bounds = array<i64: 1, 16, 256>}, {transform_indices = @transform_1, window_bounds = array<i64: 1, 5, 256>}, {transform_indices = @transform_2, window_bounds = array<i64: 2, 256>}, {transform_indices = @transform_3, window_bounds = array<i64: 1, 8, 7>}, {transform_indices = @transform_4, window_bounds = array<i64: 1, 21, 8>}, {transform_indices = @transform_5, window_bounds = array<i64: 1, 21, 256>}, {transform_indices = @transform_6, window_bounds = array<i64: 1, 1, 256>}, {transform_indices = @transform_7, window_bounds = array<i64: 1, 1, 256>}, {transform_indices = @transform_8, window_bounds = array<i64: 1, 1, 256>}, {transform_indices = @transform_9, window_bounds = array<i64: 1, 1, 8, 2>}]} {
    %c0 = arith.constant 0 : index
    %c0_0 = arith.constant 0 : index
    %c0_1 = arith.constant 0 : index
    %0 = vector.load %arg2[%c0, %c0_0, %c0_1] : memref<1x16x256xf32, #tpu.memory_space<vmem>>, vector<1x16x256xf32>
    %1 = vector.shape_cast %0 : vector<1x16x256xf32> to vector<16x256xf32>
    %c0_2 = arith.constant 0 : index
    %c0_3 = arith.constant 0 : index
    %c0_4 = arith.constant 0 : index
    %2 = vector.load %arg3[%c0_2, %c0_3, %c0_4] : memref<1x5x256xf32, #tpu.memory_space<vmem>>, vector<1x5x256xf32>
    %3 = vector.shape_cast %2 : vector<1x5x256xf32> to vector<5x256xf32>
    %c0_5 = arith.constant 0 : index
    %c0_6 = arith.constant 0 : index
    %4 = vector.load %arg4[%c0_5, %c0_6] : memref<2x256xf32, #tpu.memory_space<vmem>>, vector<2x256xf32>
    %c0_7 = arith.constant 0 : index
    %c0_8 = arith.constant 0 : index
    %c0_9 = arith.constant 0 : index
    %5 = vector.load %arg5[%c0_7, %c0_8, %c0_9] : memref<1x8x7xf32, #tpu.memory_space<vmem>>, vector<1x8x7xf32>
    %6 = vector.shape_cast %5 : vector<1x8x7xf32> to vector<8x7xf32>
    %c256_i32 = arith.constant 256 : i32
    %7 = arith.muli %arg1, %c256_i32 : i32
    %8 = vector.extract_strided_slice %4 {offsets = [0, 0], sizes = [1, 256], strides = [1, 1]} : vector<2x256xf32> to vector<1x256xf32>
    %9 = vector.extract_strided_slice %4 {offsets = [1, 0], sizes = [1, 256], strides = [1, 1]} : vector<2x256xf32> to vector<1x256xf32>
    %10 = vector.extract_strided_slice %3 {offsets = [0, 0], sizes = [1, 256], strides = [1, 1]} : vector<5x256xf32> to vector<1x256xf32>
    %11 = vector.extract_strided_slice %3 {offsets = [1, 0], sizes = [1, 256], strides = [1, 1]} : vector<5x256xf32> to vector<1x256xf32>
    %12 = vector.extract_strided_slice %3 {offsets = [2, 0], sizes = [1, 256], strides = [1, 1]} : vector<5x256xf32> to vector<1x256xf32>
    %13 = vector.extract_strided_slice %3 {offsets = [3, 0], sizes = [1, 256], strides = [1, 1]} : vector<5x256xf32> to vector<1x256xf32>
    %14 = vector.extract_strided_slice %3 {offsets = [4, 0], sizes = [1, 256], strides = [1, 1]} : vector<5x256xf32> to vector<1x256xf32>
    %15 = vector.extract_strided_slice %6 {offsets = [0, 0], sizes = [8, 1], strides = [1, 1]} : vector<8x7xf32> to vector<8x1xf32>
    %16 = vector.extract_strided_slice %6 {offsets = [0, 1], sizes = [8, 1], strides = [1, 1]} : vector<8x7xf32> to vector<8x1xf32>
    %17 = vector.extract_strided_slice %6 {offsets = [0, 2], sizes = [8, 1], strides = [1, 1]} : vector<8x7xf32> to vector<8x1xf32>
    %18 = vector.extract_strided_slice %6 {offsets = [0, 3], sizes = [8, 1], strides = [1, 1]} : vector<8x7xf32> to vector<8x1xf32>
    %19 = vector.extract_strided_slice %6 {offsets = [0, 4], sizes = [8, 1], strides = [1, 1]} : vector<8x7xf32> to vector<8x1xf32>
    %20 = vector.extract_strided_slice %6 {offsets = [0, 5], sizes = [8, 1], strides = [1, 1]} : vector<8x7xf32> to vector<8x1xf32>
    %21 = vector.extract_strided_slice %6 {offsets = [0, 6], sizes = [8, 1], strides = [1, 1]} : vector<8x7xf32> to vector<8x1xf32>
    %22 = tpu.iota {dimensions = array<i32: 1>} : vector<1x256xi32>
    %23 = vector.broadcast %7 : i32 to vector<1x256xi32>
    %24 = arith.addi %22, %23 : vector<1x256xi32>
    %c256_i32_10 = arith.constant 256 : i32
    %25 = vector.broadcast %c256_i32_10 : i32 to vector<1x256xi32>
    %26 = arith.cmpi slt, %24, %25 : vector<1x256xi32>
    %27 = vector.broadcast %8 : vector<1x256xf32> to vector<8x256xf32>
    %28 = vector.broadcast %15 : vector<8x1xf32> to vector<8x256xf32>
    %29 = arith.subf %27, %28 : vector<8x256xf32>
    %30 = vector.broadcast %9 : vector<1x256xf32> to vector<8x256xf32>
    %31 = vector.broadcast %16 : vector<8x1xf32> to vector<8x256xf32>
    %32 = arith.subf %30, %31 : vector<8x256xf32>
    %33 = arith.minimumf %29, %32 : vector<8x256xf32>
    %34 = vector.broadcast %17 : vector<8x1xf32> to vector<8x256xf32>
    %35 = vector.broadcast %8 : vector<1x256xf32> to vector<8x256xf32>
    %36 = arith.subf %34, %35 : vector<8x256xf32>
    %37 = vector.broadcast %18 : vector<8x1xf32> to vector<8x256xf32>
    %38 = vector.broadcast %9 : vector<1x256xf32> to vector<8x256xf32>
    %39 = arith.subf %37, %38 : vector<8x256xf32>
    %40 = arith.minimumf %36, %39 : vector<8x256xf32>
    %41 = arith.minimumf %33, %40 : vector<8x256xf32>
    %cst = arith.constant 9.99999971E-10 : f32
    %42 = vector.broadcast %cst : f32 to vector<8x256xf32>
    %43 = arith.cmpf ogt, %41, %42 : vector<8x256xf32>
    %44 = vector.broadcast %26 : vector<1x256xi1> to vector<8x256xi1>
    %45 = arith.andi %43, %44 : vector<8x256xi1>
    %46 = arith.extui %45 : vector<8x256xi1> to vector<8x256xi32>
    %47 = arith.sitofp %46 : vector<8x256xi32> to vector<8x256xf32>
    %48 = vector.broadcast %21 : vector<8x1xf32> to vector<8x256xf32>
    %49 = arith.mulf %47, %48 : vector<8x256xf32>
    %cst_11 = arith.constant 0.000000e+00 : f32
    %50 = vector.broadcast %cst_11 : f32 to vector<8x256xf32>
    %51 = arith.cmpf ogt, %49, %50 : vector<8x256xf32>
    %52 = tpu.iota {dimensions = array<i32: 1>} : vector<1x16xi32>
    %53 = arith.fptosi %19 : vector<8x1xf32> to vector<8x1xi32>
    %54 = vector.broadcast %52 : vector<1x16xi32> to vector<8x16xi32>
    %55 = vector.broadcast %53 : vector<8x1xi32> to vector<8x16xi32>
    %56 = arith.cmpi eq, %54, %55 : vector<8x16xi32>
    %57 = arith.extui %56 : vector<8x16xi1> to vector<8x16xi32>
    %58 = arith.sitofp %57 : vector<8x16xi32> to vector<8x16xf32>
    %cst_12 = arith.constant dense<0.000000e+00> : vector<8x256xf32>
    %59 = tpu.matmul %58, %1, %cst_12 {dimension_numbers = #tpu.dot_dimension_numbers<[1], [0], [0], [1], [0, 0, 1, 1], [], []>} : vector<8x16xf32>, vector<16x256xf32>, vector<8x256xf32> -> vector<8x256xf32>
    %cst_13 = arith.constant 0.000000e+00 : f32
    %60 = vector.broadcast %cst_13 : f32 to vector<8x256xf32>
    %61 = arith.select %51, %59, %60 : vector<8x256xi1>, vector<8x256xf32>
    %62 = arith.subf %17, %15 : vector<8x1xf32>
    %63 = arith.subf %18, %16 : vector<8x1xf32>
    %64 = arith.subf %12, %10 : vector<1x256xf32>
    %65 = arith.subf %13, %11 : vector<1x256xf32>
    %66 = vector.broadcast %17 : vector<8x1xf32> to vector<8x256xf32>
    %67 = vector.broadcast %12 : vector<1x256xf32> to vector<8x256xf32>
    %68 = arith.minimumf %66, %67 : vector<8x256xf32>
    %69 = vector.broadcast %15 : vector<8x1xf32> to vector<8x256xf32>
    %70 = vector.broadcast %10 : vector<1x256xf32> to vector<8x256xf32>
    %71 = arith.maximumf %69, %70 : vector<8x256xf32>
    %72 = arith.subf %68, %71 : vector<8x256xf32>
    %cst_14 = arith.constant 0.000000e+00 : f32
    %73 = vector.broadcast %cst_14 : f32 to vector<8x256xf32>
    %74 = arith.maximumf %72, %73 : vector<8x256xf32>
    %75 = vector.broadcast %18 : vector<8x1xf32> to vector<8x256xf32>
    %76 = vector.broadcast %13 : vector<1x256xf32> to vector<8x256xf32>
    %77 = arith.minimumf %75, %76 : vector<8x256xf32>
    %78 = vector.broadcast %16 : vector<8x1xf32> to vector<8x256xf32>
    %79 = vector.broadcast %11 : vector<1x256xf32> to vector<8x256xf32>
    %80 = arith.maximumf %78, %79 : vector<8x256xf32>
    %81 = arith.subf %77, %80 : vector<8x256xf32>
    %cst_15 = arith.constant 0.000000e+00 : f32
    %82 = vector.broadcast %cst_15 : f32 to vector<8x256xf32>
    %83 = arith.maximumf %81, %82 : vector<8x256xf32>
    %84 = arith.mulf %74, %83 : vector<8x256xf32>
    %85 = arith.mulf %62, %63 : vector<8x1xf32>
    %86 = arith.mulf %64, %65 : vector<1x256xf32>
    %87 = vector.broadcast %85 : vector<8x1xf32> to vector<8x256xf32>
    %88 = vector.broadcast %86 : vector<1x256xf32> to vector<8x256xf32>
    %89 = arith.addf %87, %88 : vector<8x256xf32>
    %90 = arith.subf %89, %84 : vector<8x256xf32>
    %cst_16 = arith.constant 1.000000e-07 : f32
    %91 = vector.broadcast %cst_16 : f32 to vector<8x256xf32>
    %92 = arith.addf %90, %91 : vector<8x256xf32>
    %93 = tpu.reciprocal %92 {approx = true} : vector<8x256xf32> -> vector<8x256xf32>
    %94 = arith.mulf %84, %93 : vector<8x256xf32>
    %95 = vector.broadcast %17 : vector<8x1xf32> to vector<8x256xf32>
    %96 = vector.broadcast %12 : vector<1x256xf32> to vector<8x256xf32>
    %97 = arith.maximumf %95, %96 : vector<8x256xf32>
    %98 = vector.broadcast %15 : vector<8x1xf32> to vector<8x256xf32>
    %99 = vector.broadcast %10 : vector<1x256xf32> to vector<8x256xf32>
    %100 = arith.minimumf %98, %99 : vector<8x256xf32>
    %101 = arith.subf %97, %100 : vector<8x256xf32>
    %102 = vector.broadcast %18 : vector<8x1xf32> to vector<8x256xf32>
    %103 = vector.broadcast %13 : vector<1x256xf32> to vector<8x256xf32>
    %104 = arith.maximumf %102, %103 : vector<8x256xf32>
    %105 = vector.broadcast %16 : vector<8x1xf32> to vector<8x256xf32>
    %106 = vector.broadcast %11 : vector<1x256xf32> to vector<8x256xf32>
    %107 = arith.minimumf %105, %106 : vector<8x256xf32>
    %108 = arith.subf %104, %107 : vector<8x256xf32>
    %109 = arith.mulf %101, %101 : vector<8x256xf32>
    %110 = arith.mulf %108, %108 : vector<8x256xf32>
    %111 = arith.addf %109, %110 : vector<8x256xf32>
    %cst_17 = arith.constant 1.000000e-07 : f32
    %112 = vector.broadcast %cst_17 : f32 to vector<8x256xf32>
    %113 = arith.addf %111, %112 : vector<8x256xf32>
    %114 = arith.addf %10, %12 : vector<1x256xf32>
    %115 = vector.broadcast %114 : vector<1x256xf32> to vector<8x256xf32>
    %116 = vector.broadcast %15 : vector<8x1xf32> to vector<8x256xf32>
    %117 = arith.subf %115, %116 : vector<8x256xf32>
    %118 = vector.broadcast %17 : vector<8x1xf32> to vector<8x256xf32>
    %119 = arith.subf %117, %118 : vector<8x256xf32>
    %120 = arith.addf %11, %13 : vector<1x256xf32>
    %121 = vector.broadcast %120 : vector<1x256xf32> to vector<8x256xf32>
    %122 = vector.broadcast %16 : vector<8x1xf32> to vector<8x256xf32>
    %123 = arith.subf %121, %122 : vector<8x256xf32>
    %124 = vector.broadcast %18 : vector<8x1xf32> to vector<8x256xf32>
    %125 = arith.subf %123, %124 : vector<8x256xf32>
    %126 = arith.mulf %119, %119 : vector<8x256xf32>
    %127 = arith.mulf %125, %125 : vector<8x256xf32>
    %128 = arith.addf %126, %127 : vector<8x256xf32>
    %cst_18 = arith.constant 2.500000e-01 : f32
    %129 = vector.broadcast %cst_18 : f32 to vector<8x256xf32>
    %130 = arith.mulf %128, %129 : vector<8x256xf32>
    %131 = vector.broadcast %14 : vector<1x256xf32> to vector<8x256xf32>
    %132 = vector.broadcast %20 : vector<8x1xf32> to vector<8x256xf32>
    %133 = arith.subf %131, %132 : vector<8x256xf32>
    %cst_19 = arith.constant 0.405284733 : f32
    %134 = vector.broadcast %cst_19 : f32 to vector<8x256xf32>
    %135 = arith.mulf %134, %133 : vector<8x256xf32>
    %136 = arith.mulf %135, %133 : vector<8x256xf32>
    %137 = arith.subf %136, %94 : vector<8x256xf32>
    %cst_20 = arith.constant 1.00000012 : f32
    %138 = vector.broadcast %cst_20 : f32 to vector<8x256xf32>
    %139 = arith.addf %137, %138 : vector<8x256xf32>
    %140 = tpu.reciprocal %139 {approx = true} : vector<8x256xf32> -> vector<8x256xf32>
    %141 = arith.mulf %136, %140 : vector<8x256xf32>
    %142 = tpu.reciprocal %113 {approx = true} : vector<8x256xf32> -> vector<8x256xf32>
    %143 = arith.mulf %130, %142 : vector<8x256xf32>
    %144 = arith.mulf %136, %141 : vector<8x256xf32>
    %145 = arith.addf %143, %144 : vector<8x256xf32>
    %146 = arith.subf %94, %145 : vector<8x256xf32>
    %cst_21 = arith.constant 0.000000e+00 : f32
    %147 = vector.broadcast %cst_21 : f32 to vector<8x256xf32>
    %148 = arith.maximumf %146, %147 : vector<8x256xf32>
    %cst_22 = arith.constant 0.000000e+00 : f32
    %149 = vector.broadcast %cst_22 : f32 to vector<8x256xf32>
    %150 = arith.select %51, %148, %149 : vector<8x256xi1>, vector<8x256xf32>
    %151 = arith.mulf %150, %150 : vector<8x256xf32>
    %152 = arith.mulf %151, %151 : vector<8x256xf32>
    %153 = arith.mulf %151, %152 : vector<8x256xf32>
    %154 = arith.mulf %61, %153 : vector<8x256xf32>
    %155 = arith.sitofp %24 : vector<1x256xi32> to vector<1x256xf32>
    %cst_23 = arith.constant 1.000000e+00 : f32
    %156 = vector.broadcast %cst_23 : f32 to vector<1x256xf32>
    %157 = arith.addf %155, %156 : vector<1x256xf32>
    %cst_24 = arith.constant 0.000000e+00 : f32
    %158 = vector.broadcast %cst_24 : f32 to vector<1x256xf32>
    %159 = arith.subf %158, %157 : vector<1x256xf32>
    %cst_25 = arith.constant 1.000000e-30 : f32
    %160 = vector.broadcast %cst_25 : f32 to vector<1x256xf32>
    %161 = arith.mulf %159, %160 : vector<1x256xf32>
    %cst_26 = arith.constant 0.000000e+00 : f32
    %162 = vector.broadcast %cst_26 : f32 to vector<8x256xf32>
    %163 = arith.cmpf ogt, %154, %162 : vector<8x256xf32>
    %164 = vector.shape_cast %161 : vector<1x256xf32> to vector<1x256xf32>
    %165 = vector.broadcast %164 : vector<1x256xf32> to vector<8x256xf32>
    %166 = arith.select %163, %154, %165 : vector<8x256xi1>, vector<8x256xf32>
    %cst_27 = arith.constant dense<0xFF800000> : vector<8xf32>
    %167 = vector.multi_reduction <maximumf>, %166, %cst_27 [1] : vector<8x256xf32> to vector<8xf32>
    %168 = vector.shape_cast %167 : vector<8xf32> to vector<8x1xf32>
    %169 = vector.broadcast %168 : vector<8x1xf32> to vector<8x256xf32>
    %170 = arith.cmpf oeq, %166, %169 : vector<8x256xf32>
    %cst_28 = arith.constant 0xFF800000 : f32
    %171 = vector.broadcast %cst_28 : f32 to vector<8x256xf32>
    %172 = arith.select %170, %171, %166 : vector<8x256xi1>, vector<8x256xf32>
    %cst_29 = arith.constant dense<0xFF800000> : vector<8xf32>
    %173 = vector.multi_reduction <maximumf>, %172, %cst_29 [1] : vector<8x256xf32> to vector<8xf32>
    %174 = vector.shape_cast %173 : vector<8xf32> to vector<8x1xf32>
    %175 = vector.broadcast %174 : vector<8x1xf32> to vector<8x256xf32>
    %176 = arith.cmpf oeq, %172, %175 : vector<8x256xf32>
    %cst_30 = arith.constant 0xFF800000 : f32
    %177 = vector.broadcast %cst_30 : f32 to vector<8x256xf32>
    %178 = arith.select %176, %177, %172 : vector<8x256xi1>, vector<8x256xf32>
    %cst_31 = arith.constant dense<0xFF800000> : vector<8xf32>
    %179 = vector.multi_reduction <maximumf>, %178, %cst_31 [1] : vector<8x256xf32> to vector<8xf32>
    %180 = vector.shape_cast %179 : vector<8xf32> to vector<8x1xf32>
    %181 = vector.broadcast %180 : vector<8x1xf32> to vector<8x256xf32>
    %182 = arith.cmpf oeq, %178, %181 : vector<8x256xf32>
    %cst_32 = arith.constant 0xFF800000 : f32
    %183 = vector.broadcast %cst_32 : f32 to vector<8x256xf32>
    %184 = arith.select %182, %183, %178 : vector<8x256xi1>, vector<8x256xf32>
    %cst_33 = arith.constant dense<0xFF800000> : vector<8xf32>
    %185 = vector.multi_reduction <maximumf>, %184, %cst_33 [1] : vector<8x256xf32> to vector<8xf32>
    %186 = vector.shape_cast %185 : vector<8xf32> to vector<8x1xf32>
    %187 = vector.broadcast %186 : vector<8x1xf32> to vector<8x256xf32>
    %188 = arith.cmpf oeq, %184, %187 : vector<8x256xf32>
    %cst_34 = arith.constant 0xFF800000 : f32
    %189 = vector.broadcast %cst_34 : f32 to vector<8x256xf32>
    %190 = arith.select %188, %189, %184 : vector<8x256xi1>, vector<8x256xf32>
    %cst_35 = arith.constant dense<0xFF800000> : vector<8xf32>
    %191 = vector.multi_reduction <maximumf>, %190, %cst_35 [1] : vector<8x256xf32> to vector<8xf32>
    %192 = vector.shape_cast %191 : vector<8xf32> to vector<8x1xf32>
    %193 = vector.broadcast %192 : vector<8x1xf32> to vector<8x256xf32>
    %194 = arith.cmpf oeq, %190, %193 : vector<8x256xf32>
    %cst_36 = arith.constant 0xFF800000 : f32
    %195 = vector.broadcast %cst_36 : f32 to vector<8x256xf32>
    %196 = arith.select %194, %195, %190 : vector<8x256xi1>, vector<8x256xf32>
    %cst_37 = arith.constant dense<0xFF800000> : vector<8xf32>
    %197 = vector.multi_reduction <maximumf>, %196, %cst_37 [1] : vector<8x256xf32> to vector<8xf32>
    %198 = vector.shape_cast %197 : vector<8xf32> to vector<8x1xf32>
    %199 = vector.broadcast %198 : vector<8x1xf32> to vector<8x256xf32>
    %200 = arith.cmpf oeq, %196, %199 : vector<8x256xf32>
    %cst_38 = arith.constant 0xFF800000 : f32
    %201 = vector.broadcast %cst_38 : f32 to vector<8x256xf32>
    %202 = arith.select %200, %201, %196 : vector<8x256xi1>, vector<8x256xf32>
    %cst_39 = arith.constant dense<0xFF800000> : vector<8xf32>
    %203 = vector.multi_reduction <maximumf>, %202, %cst_39 [1] : vector<8x256xf32> to vector<8xf32>
    %204 = vector.shape_cast %203 : vector<8xf32> to vector<8x1xf32>
    %205 = vector.broadcast %204 : vector<8x1xf32> to vector<8x256xf32>
    %206 = arith.cmpf oeq, %202, %205 : vector<8x256xf32>
    %cst_40 = arith.constant 0xFF800000 : f32
    %207 = vector.broadcast %cst_40 : f32 to vector<8x256xf32>
    %208 = arith.select %206, %207, %202 : vector<8x256xi1>, vector<8x256xf32>
    %cst_41 = arith.constant dense<0xFF800000> : vector<8xf32>
    %209 = vector.multi_reduction <maximumf>, %208, %cst_41 [1] : vector<8x256xf32> to vector<8xf32>
    %210 = vector.shape_cast %209 : vector<8xf32> to vector<8x1xf32>
    %211 = vector.broadcast %210 : vector<8x1xf32> to vector<8x256xf32>
    %212 = arith.cmpf oeq, %208, %211 : vector<8x256xf32>
    %cst_42 = arith.constant 0xFF800000 : f32
    %213 = vector.broadcast %cst_42 : f32 to vector<8x256xf32>
    %214 = arith.select %212, %213, %208 : vector<8x256xi1>, vector<8x256xf32>
    %cst_43 = arith.constant dense<0xFF800000> : vector<8xf32>
    %215 = vector.multi_reduction <maximumf>, %214, %cst_43 [1] : vector<8x256xf32> to vector<8xf32>
    %216 = vector.shape_cast %215 : vector<8xf32> to vector<8x1xf32>
    %217 = vector.broadcast %216 : vector<8x1xf32> to vector<8x256xf32>
    %218 = arith.cmpf oeq, %214, %217 : vector<8x256xf32>
    %cst_44 = arith.constant 0xFF800000 : f32
    %219 = vector.broadcast %cst_44 : f32 to vector<8x256xf32>
    %220 = arith.select %218, %219, %214 : vector<8x256xi1>, vector<8x256xf32>
    %cst_45 = arith.constant dense<0xFF800000> : vector<8xf32>
    %221 = vector.multi_reduction <maximumf>, %220, %cst_45 [1] : vector<8x256xf32> to vector<8xf32>
    %222 = vector.shape_cast %221 : vector<8xf32> to vector<8x1xf32>
    %223 = vector.broadcast %222 : vector<8x1xf32> to vector<8x256xf32>
    %224 = arith.cmpf oeq, %220, %223 : vector<8x256xf32>
    %cst_46 = arith.constant 0xFF800000 : f32
    %225 = vector.broadcast %cst_46 : f32 to vector<8x256xf32>
    %226 = arith.select %224, %225, %220 : vector<8x256xi1>, vector<8x256xf32>
    %cst_47 = arith.constant dense<0xFF800000> : vector<8xf32>
    %227 = vector.multi_reduction <maximumf>, %226, %cst_47 [1] : vector<8x256xf32> to vector<8xf32>
    %228 = vector.shape_cast %227 : vector<8xf32> to vector<8x1xf32>
    %229 = vector.broadcast %228 : vector<8x1xf32> to vector<8x256xf32>
    %230 = arith.cmpf oeq, %226, %229 : vector<8x256xf32>
    %cst_48 = arith.constant 0xFF800000 : f32
    %231 = vector.broadcast %cst_48 : f32 to vector<8x256xf32>
    %232 = arith.select %230, %231, %226 : vector<8x256xi1>, vector<8x256xf32>
    %cst_49 = arith.constant dense<0xFF800000> : vector<8xf32>
    %233 = vector.multi_reduction <maximumf>, %232, %cst_49 [1] : vector<8x256xf32> to vector<8xf32>
    %234 = vector.shape_cast %233 : vector<8xf32> to vector<8x1xf32>
    %235 = vector.broadcast %234 : vector<8x1xf32> to vector<8x256xf32>
    %236 = arith.cmpf oeq, %232, %235 : vector<8x256xf32>
    %cst_50 = arith.constant 0xFF800000 : f32
    %237 = vector.broadcast %cst_50 : f32 to vector<8x256xf32>
    %238 = arith.select %236, %237, %232 : vector<8x256xi1>, vector<8x256xf32>
    %cst_51 = arith.constant dense<0xFF800000> : vector<8xf32>
    %239 = vector.multi_reduction <maximumf>, %238, %cst_51 [1] : vector<8x256xf32> to vector<8xf32>
    %240 = vector.shape_cast %239 : vector<8xf32> to vector<8x1xf32>
    %241 = vector.broadcast %240 : vector<8x1xf32> to vector<8x256xf32>
    %242 = arith.cmpf oge, %166, %241 : vector<8x256xf32>
    %cst_52 = arith.constant 0.000000e+00 : f32
    %243 = vector.broadcast %cst_52 : f32 to vector<8x256xf32>
    %244 = arith.select %242, %49, %243 : vector<8x256xi1>, vector<8x256xf32>
    %cst_53 = arith.constant dense<0.000000e+00> : vector<256xf32>
    %245 = vector.multi_reduction <add>, %244, %cst_53 [0] : vector<8x256xf32> to vector<256xf32>
    %246 = vector.shape_cast %245 : vector<256xf32> to vector<1x256xf32>
    %247 = tpu.iota {dimensions = array<i32: 0>} : vector<8x1xi32>
    %cst_54 = arith.constant dense<0xFF800000> : vector<256xf32>
    %248 = vector.multi_reduction <maximumf>, %150, %cst_54 [0] : vector<8x256xf32> to vector<256xf32>
    %249 = vector.shape_cast %248 : vector<256xf32> to vector<1x256xf32>
    %250 = vector.broadcast %249 : vector<1x256xf32> to vector<8x256xf32>
    %251 = arith.cmpf oeq, %150, %250 : vector<8x256xf32>
    %c8_i32 = arith.constant 8 : i32
    %252 = vector.shape_cast %247 : vector<8x1xi32> to vector<8x1xi32>
    %253 = vector.broadcast %252 : vector<8x1xi32> to vector<8x256xi32>
    %254 = vector.broadcast %c8_i32 : i32 to vector<8x256xi32>
    %255 = arith.select %251, %253, %254 : vector<8x256xi1>, vector<8x256xi32>
    %cst_55 = arith.constant dense<2147483647> : vector<256xi32>
    %256 = vector.multi_reduction <minsi>, %255, %cst_55 [0] : vector<8x256xi32> to vector<256xi32>
    %257 = vector.shape_cast %256 : vector<256xi32> to vector<1x256xi32>
    %258 = vector.broadcast %247 : vector<8x1xi32> to vector<8x256xi32>
    %259 = vector.broadcast %257 : vector<1x256xi32> to vector<8x256xi32>
    %260 = arith.cmpi eq, %258, %259 : vector<8x256xi32>
    %261 = arith.extui %260 : vector<8x256xi1> to vector<8x256xi32>
    %262 = arith.sitofp %261 : vector<8x256xi32> to vector<8x256xf32>
    %cst_56 = arith.constant 1.000000e+00 : f32
    %263 = vector.broadcast %cst_56 : f32 to vector<1x256xf32>
    %264 = arith.cmpf ogt, %246, %263 : vector<1x256xf32>
    %265 = vector.shape_cast %264 : vector<1x256xi1> to vector<1x256xi1>
    %266 = vector.broadcast %265 : vector<1x256xi1> to vector<8x256xi1>
    %267 = arith.select %266, %262, %244 : vector<8x256xi1>, vector<8x256xf32>
    %cst_57 = arith.constant 0.000000e+00 : f32
    %268 = vector.broadcast %cst_57 : f32 to vector<1x256xf32>
    %269 = arith.cmpf ogt, %246, %268 : vector<1x256xf32>
    %270 = arith.sitofp %247 : vector<8x1xi32> to vector<8x1xf32>
    %271 = vector.broadcast %270 : vector<8x1xf32> to vector<8x256xf32>
    %272 = arith.mulf %271, %267 : vector<8x256xf32>
    %cst_58 = arith.constant dense<0.000000e+00> : vector<256xf32>
    %273 = vector.multi_reduction <add>, %272, %cst_58 [0] : vector<8x256xf32> to vector<256xf32>
    %274 = vector.shape_cast %273 : vector<256xf32> to vector<1x256xf32>
    %275 = arith.fptosi %274 : vector<1x256xf32> to vector<1x256xi32>
    %276 = vector.broadcast %247 : vector<8x1xi32> to vector<8x256xi32>
    %277 = vector.broadcast %275 : vector<1x256xi32> to vector<8x256xi32>
    %278 = arith.cmpi eq, %276, %277 : vector<8x256xi32>
    %279 = arith.extui %278 : vector<8x256xi1> to vector<8x256xi32>
    %280 = arith.sitofp %279 : vector<8x256xi32> to vector<8x256xf32>
    %c0_59 = arith.constant 0 : index
    %c0_60 = arith.constant 0 : index
    %c0_61 = arith.constant 0 : index
    %281 = vector.load %arg6[%c0_59, %c0_60, %c0_61] : memref<1x21x8xf32, #tpu.memory_space<vmem>>, vector<1x21x8xf32>
    %282 = vector.shape_cast %281 : vector<1x21x8xf32> to vector<21x8xf32>
    %cst_62 = arith.constant dense<0.000000e+00> : vector<21x256xf32>
    %283 = tpu.matmul %282, %280, %cst_62 {dimension_numbers = #tpu.dot_dimension_numbers<[1], [0], [0], [1], [0, 0, 1, 1], [], []>} : vector<21x8xf32>, vector<8x256xf32>, vector<21x256xf32> -> vector<21x256xf32>
    %c0_63 = arith.constant 0 : index
    %c0_64 = arith.constant 0 : index
    %c0_65 = arith.constant 0 : index
    %284 = vector.load %arg7[%c0_63, %c0_64, %c0_65] : memref<1x21x256xf32, #tpu.memory_space<vmem>>, vector<1x21x256xf32>
    %285 = vector.shape_cast %284 : vector<1x21x256xf32> to vector<21x256xf32>
    %286 = vector.shape_cast %283 : vector<21x256xf32> to vector<1x21x256xf32>
    tpu.vector_store %arg7[%c0_63, %c0_64, %c0_65], %286 {strides = array<i32>} : memref<1x21x256xf32, #tpu.memory_space<vmem>>, vector<1x21x256xf32>,
    %c0_66 = arith.constant 0 : index
    %c0_67 = arith.constant 0 : index
    %c0_68 = arith.constant 0 : index
    %287 = vector.load %arg8[%c0_66, %c0_67, %c0_68] : memref<1x1x256xi32, #tpu.memory_space<vmem>>, vector<1x1x256xi32>
    %288 = vector.shape_cast %287 : vector<1x1x256xi32> to vector<1x256xi32>
    %289 = vector.shape_cast %275 : vector<1x256xi32> to vector<1x1x256xi32>
    tpu.vector_store %arg8[%c0_66, %c0_67, %c0_68], %289 {strides = array<i32>} : memref<1x1x256xi32, #tpu.memory_space<vmem>>, vector<1x1x256xi32>,
    %290 = arith.extui %269 : vector<1x256xi1> to vector<1x256xi32>
    %c0_69 = arith.constant 0 : index
    %c0_70 = arith.constant 0 : index
    %c0_71 = arith.constant 0 : index
    %291 = vector.load %arg9[%c0_69, %c0_70, %c0_71] : memref<1x1x256xi32, #tpu.memory_space<vmem>>, vector<1x1x256xi32>
    %292 = vector.shape_cast %291 : vector<1x1x256xi32> to vector<1x256xi32>
    %293 = vector.shape_cast %290 : vector<1x256xi32> to vector<1x1x256xi32>
    tpu.vector_store %arg9[%c0_69, %c0_70, %c0_71], %293 {strides = array<i32>} : memref<1x1x256xi32, #tpu.memory_space<vmem>>, vector<1x1x256xi32>,
    %294 = arith.mulf %154, %267 : vector<8x256xf32>
    %cst_72 = arith.constant dense<0xFF800000> : vector<256xf32>
    %295 = vector.multi_reduction <maximumf>, %294, %cst_72 [0] : vector<8x256xf32> to vector<256xf32>
    %296 = vector.shape_cast %295 : vector<256xf32> to vector<1x256xf32>
    %c0_73 = arith.constant 0 : index
    %c0_74 = arith.constant 0 : index
    %c0_75 = arith.constant 0 : index
    %297 = vector.load %arg10[%c0_73, %c0_74, %c0_75] : memref<1x1x256xf32, #tpu.memory_space<vmem>>, vector<1x1x256xf32>
    %298 = vector.shape_cast %297 : vector<1x1x256xf32> to vector<1x256xf32>
    %299 = vector.shape_cast %296 : vector<1x256xf32> to vector<1x1x256xf32>
    tpu.vector_store %arg10[%c0_73, %c0_74, %c0_75], %299 {strides = array<i32>} : memref<1x1x256xf32, #tpu.memory_space<vmem>>, vector<1x1x256xf32>,
    %cst_76 = arith.constant dense<0xFF800000> : vector<8xf32>
    %300 = vector.multi_reduction <maximumf>, %294, %cst_76 [1] : vector<8x256xf32> to vector<8xf32>
    %301 = vector.shape_cast %300 : vector<8xf32> to vector<8x1xf32>
    %c0_77 = arith.constant 0 : index
    %c0_78 = arith.constant 0 : index
    %c0_79 = arith.constant 0 : index
    %c0_80 = arith.constant 0 : index
    %302 = vector.load %arg11[%c0_77, %c0_78, %c0_79, %c0_80] : memref<1x1x8x2xf32, #tpu.memory_space<vmem>>, vector<1x1x8x1xf32>
    %303 = vector.shape_cast %302 : vector<1x1x8x1xf32> to vector<8x1xf32>
    %304 = vector.shape_cast %301 : vector<8x1xf32> to vector<1x1x8x1xf32>
    tpu.vector_store %arg11[%c0_77, %c0_78, %c0_79, %c0_80], %304 {strides = array<i32>} : memref<1x1x8x2xf32, #tpu.memory_space<vmem>>, vector<1x1x8x1xf32>,
    %305 = arith.mulf %150, %267 : vector<8x256xf32>
    %cst_81 = arith.constant dense<0xFF800000> : vector<8xf32>
    %306 = vector.multi_reduction <maximumf>, %305, %cst_81 [1] : vector<8x256xf32> to vector<8xf32>
    %307 = vector.shape_cast %306 : vector<8xf32> to vector<8x1xf32>
    %c0_82 = arith.constant 0 : index
    %c0_83 = arith.constant 0 : index
    %c0_84 = arith.constant 0 : index
    %c1 = arith.constant 1 : index
    %308 = vector.load %arg11[%c0_82, %c0_83, %c0_84, %c1] : memref<1x1x8x2xf32, #tpu.memory_space<vmem>>, vector<1x1x8x1xf32>
    %309 = vector.shape_cast %308 : vector<1x1x8x1xf32> to vector<8x1xf32>
    %310 = vector.shape_cast %307 : vector<8x1xf32> to vector<1x1x8x1xf32>
    tpu.vector_store %arg11[%c0_82, %c0_83, %c0_84, %c1], %310 {strides = array<i32>} : memref<1x1x8x2xf32, #tpu.memory_space<vmem>>, vector<1x1x8x1xf32>,
    return
  }
  func.func @transform_0(%arg0: i32, %arg1: i32) -> (i32, i32, i32) {
    %c0_i32 = arith.constant 0 : i32
    %c0_i32_0 = arith.constant 0 : i32
    return %arg0, %c0_i32, %arg1 : i32, i32, i32
  }
  func.func @transform_1(%arg0: i32, %arg1: i32) -> (i32, i32, i32) {
    %c0_i32 = arith.constant 0 : i32
    %c0_i32_0 = arith.constant 0 : i32
    return %arg0, %c0_i32, %arg1 : i32, i32, i32
  }
  func.func @transform_2(%arg0: i32, %arg1: i32) -> (i32, i32) {
    %c0_i32 = arith.constant 0 : i32
    %c0_i32_0 = arith.constant 0 : i32
    return %c0_i32, %arg1 : i32, i32
  }
  func.func @transform_3(%arg0: i32, %arg1: i32) -> (i32, i32, i32) {
    %c0_i32 = arith.constant 0 : i32
    %c0_i32_0 = arith.constant 0 : i32
    %c0_i32_1 = arith.constant 0 : i32
    return %arg0, %c0_i32, %c0_i32_0 : i32, i32, i32
  }
  func.func @transform_4(%arg0: i32, %arg1: i32) -> (i32, i32, i32) {
    %c0_i32 = arith.constant 0 : i32
    %c0_i32_0 = arith.constant 0 : i32
    %c0_i32_1 = arith.constant 0 : i32
    return %arg0, %c0_i32, %c0_i32_0 : i32, i32, i32
  }
  func.func @transform_5(%arg0: i32, %arg1: i32) -> (i32, i32, i32) {
    %c0_i32 = arith.constant 0 : i32
    %c0_i32_0 = arith.constant 0 : i32
    return %arg0, %c0_i32, %arg1 : i32, i32, i32
  }
  func.func @transform_6(%arg0: i32, %arg1: i32) -> (i32, i32, i32) {
    %c0_i32 = arith.constant 0 : i32
    %c0_i32_0 = arith.constant 0 : i32
    return %arg0, %c0_i32, %arg1 : i32, i32, i32
  }
  func.func @transform_7(%arg0: i32, %arg1: i32) -> (i32, i32, i32) {
    %c0_i32 = arith.constant 0 : i32
    %c0_i32_0 = arith.constant 0 : i32
    return %arg0, %c0_i32, %arg1 : i32, i32, i32
  }
  func.func @transform_8(%arg0: i32, %arg1: i32) -> (i32, i32, i32) {
    %c0_i32 = arith.constant 0 : i32
    %c0_i32_0 = arith.constant 0 : i32
    return %arg0, %c0_i32, %arg1 : i32, i32, i32
  }
  func.func @transform_9(%arg0: i32, %arg1: i32) -> (i32, i32, i32, i32) {
    %c0_i32 = arith.constant 0 : i32
    %c0_i32_0 = arith.constant 0 : i32
    %c0_i32_1 = arith.constant 0 : i32
    return %arg0, %arg1, %c0_i32, %c0_i32_0 : i32, i32, i32, i32
  }
}

</mosaic_0001>

<llo_original>
// kernel: tpu_custom_call.1
$region0: #{tpu_custom_call.1}
  #allocation0 [shape = 'u32[]', space=smem, size = 0x4, offset = 0x4, fixed_abs, tag = 'smem constant byte address 0x4 - core index']
  #allocation1 [shape = 'u32[144,128]{1,0:T(1,128)}', space=vmem, size = 0x12000, scoped, tag = 'internal scratch']
  %s0 = inlined_call_operand.vmem [shape: f32[2,16,256], index: 0, kind: input, shape index: {}]
  %s1 = inlined_call_operand.vmem [shape: f32[2,5,256], index: 1, kind: input, shape index: {}]
  %s2 = inlined_call_operand.vmem [shape: f32[2,256], index: 2, kind: input, shape index: {}]
  %s3 = inlined_call_operand.vmem [shape: f32[2,8,7], index: 3, kind: input, shape index: {}]
  %s4 = inlined_call_operand.vmem [shape: f32[2,21,8], index: 4, kind: input, shape index: {}]
  %s5 = inlined_call_operand.vmem [shape: f32[2,21,256], index: 5, kind: output, shape index: {0}]
  %s6 = inlined_call_operand.hbm [shape: s32[2,1,256], index: 6, kind: output, shape index: {1}]
  %s7 = inlined_call_operand.hbm [shape: s32[2,1,256], index: 7, kind: output, shape index: {2}]
  %s8 = inlined_call_operand.hbm [shape: f32[2,1,256], index: 8, kind: output, shape index: {3}]
  %s9 = inlined_call_operand.vmem [shape: f32[2,1,8,2], index: 9, kind: output, shape index: {4}]
  %10 = xla_tuple %s5, %s6, %s7, %s8, %s9
  %s11 = sld [smem:[#allocation0]]
  $region85: #{tpu_custom_call.1} parent=0
    _
  %s13 = ssub.s32 1, %s11
  %s14 = scalar_select 0, %s13, %s11
  $region1: #{tpu_custom_call.1} parent=0
    #allocation2 [shape = 'u8[2048]{0}', space=vmem, size = 0x800, scoped, tag = 'output window, operand 1']
    #allocation3 [shape = 's32[2]{0}', space=sflag, size = 0x8, scoped, tag = 'scoped memory for tpu_custom_call.1']
    #allocation4 [shape = 'u8[2048]{0}', space=vmem, size = 0x800, scoped, tag = 'output window, operand 2']
    #allocation5 [shape = 's32[2]{0}', space=sflag, size = 0x8, scoped, tag = 'scoped memory for tpu_custom_call.1']
    #allocation6 [shape = 'u8[2048]{0}', space=vmem, size = 0x800, scoped, tag = 'output window, operand 3']
    %15 = vsyncpa [#allocation3], 0
    %s16 = scalar_lea.sflag [#allocation3], 1
    %17 = vsyncpa %s16, 0
    %18 = vsyncpa [#allocation5], 0
    %s19 = scalar_lea.sflag [#allocation5], 1
    %20 = vsyncpa %s19, 0
    loop: start=0, step=1, limit=4
    $region2: #{tpu_custom_call.1} parent=1 // loop_pre_header
      _
    $region3: #{tpu_custom_call.1} parent=1 // loop_header
      %s22 = sphi 0, %s26
      %p23 = scmp.ge.s32.totalorder %s22, 4
      %s29 = sphi 0, %s41
      %s30 = sphi 0, %s37
      %s31 = sphi 0, %s29
      %s32 = sphi 0, %s30
      %s33 = sphi 0, %s31
      %s34 = sphi 0, %s32
      %s46 = sphi 0, %s48
      %s49 = sphi 0, %s46
      %s50 = sphi 0, %s49
      %s66 = sphi 0, %s50
      %s74 = sphi 0, %s76
      %s77 = sphi 0, %s74
      %s78 = sphi 0, %s77
      %s94 = sphi 0, %s78
      %s100 = sphi 0, %s102
      %s103 = sphi 0, %s100
      %s104 = sphi 0, %s103
      %s120 = sphi 0, %s104
      %s126 = sphi 0, %s128
      %s129 = sphi 0, %s126
      %s130 = sphi 0, %s129
      %s146 = sphi 0, %s130
      %s152 = sphi 0, %s154
      %s155 = sphi 0, %s152
      %s156 = sphi 0, %s155
      %s172 = sphi 0, %s156
      %s180 = sphi 0, %s182
      %s183 = sphi 0, %s180
      %s184 = sphi 0, %s183
      %s200 = sphi 0, %s184
      %s208 = sphi 0, %s210
      %s211 = sphi 0, %s208
      %s212 = sphi 0, %s211
      %s228 = sphi 0, %s212
      %s236 = sphi 0, %s238
      %s239 = sphi 0, %s236
      %s240 = sphi 0, %s239
      %s256 = sphi 0, %s240
      %s264 = sphi 0, %s266
      %s267 = sphi 0, %s264
      %s268 = sphi 0, %s267
      %s284 = sphi 0, %s268
      %s292 = sphi 0, %s294
      %s295 = sphi 0, %s292
      %s296 = sphi 0, %s295
      %s312 = sphi 0, %s296
    $region4: #{tpu_custom_call.1} parent=1 // loop_header_branch
      %25 = sbr.rel (%p23) target = $region8
    $region5: #{tpu_custom_call.1} parent=1 // loop_body
      %s27 = ssub.s32 %s22, 1
      %s28 = ssub.s32 %s22, 2
      %s35 = sadd.s32 1, %s30
      %p36 = scmp.ge.s32.totalorder %s35, 1
      %s37 = scalar_select %p36, 0, %s35
      %s38 = sadd.s32 1, %s29
      %s39 = scalar_select %p36, %s38, %s29
      %p40 = scmp.ge.s32.totalorder %s39, 2
      %s41 = scalar_select %p40, 0, %s39
      %s42 = ssub.s32 %s29, %s41
      %s43 = ssub.s32 %s30, %s37
      %s44 = sor.u32 %s42, %s43
      %p45 = scmp.eq.s32.totalorder %s44, 0
      %s47 = sadd.s32 %s46, 1
      %s48 = scalar_select %p45, %s46, %s47
      %p51 = pneg %p45
      %p52 = scmp.eq.s32.totalorder %s22, 1
      %p53 = por %p51, %p52
      %p54 = scmp.ne.s32.totalorder %s46, %s49
      %p55 = scmp.eq.s32.totalorder %s22, 0
      %p56 = por %p54, %p55
      %p57 = scmp.ne.s32.totalorder %s46, %s49
      %p58 = scmp.eq.s32.totalorder %s27, 1
      %p59 = por %p57, %p58
      %p60 = scmp.ne.s32.totalorder %s49, %s50
      %p61 = scmp.eq.s32.totalorder %s27, 0
      %p62 = por %p60, %p61
      %p63 = scmp.ne.s32.totalorder %s49, %s50
      %p64 = scmp.eq.s32.totalorder %s28, 1
      %p65 = por %p63, %p64
      %p67 = scmp.ne.s32.totalorder %s50, %s66
      %p68 = scmp.eq.s32.totalorder %s28, 0
      %p69 = por %p67, %p68
      %s70 = ssub.s32 %s29, %s41
      %s71 = ssub.s32 %s30, %s37
      %s72 = sor.u32 %s70, %s71
      %p73 = scmp.eq.s32.totalorder %s72, 0
      %s75 = sadd.s32 %s74, 1
      %s76 = scalar_select %p73, %s74, %s75
      %p79 = pneg %p73
      %p80 = scmp.eq.s32.totalorder %s22, 1
      %p81 = por %p79, %p80
      %p82 = scmp.ne.s32.totalorder %s74, %s77
      %p83 = scmp.eq.s32.totalorder %s22, 0
      %p84 = por %p82, %p83
      %p85 = scmp.ne.s32.totalorder %s74, %s77
      %p86 = scmp.eq.s32.totalorder %s27, 1
      %p87 = por %p85, %p86
      %p88 = scmp.ne.s32.totalorder %s77, %s78
      %p89 = scmp.eq.s32.totalorder %s27, 0
      %p90 = por %p88, %p89
      %p91 = scmp.ne.s32.totalorder %s77, %s78
      %p92 = scmp.eq.s32.totalorder %s28, 1
      %p93 = por %p91, %p92
      %p95 = scmp.ne.s32.totalorder %s78, %s94
      %p96 = scmp.eq.s32.totalorder %s28, 0
      %p97 = por %p95, %p96
      %s98 = ssub.s32 %s30, %s37
      %p99 = scmp.eq.s32.totalorder %s98, 0
      %s101 = sadd.s32 %s100, 1
      %s102 = scalar_select %p99, %s100, %s101
      %p105 = pneg %p99
      %p106 = scmp.eq.s32.totalorder %s22, 1
      %p107 = por %p105, %p106
      %p108 = scmp.ne.s32.totalorder %s100, %s103
      %p109 = scmp.eq.s32.totalorder %s22, 0
      %p110 = por %p108, %p109
      %p111 = scmp.ne.s32.totalorder %s100, %s103
      %p112 = scmp.eq.s32.totalorder %s27, 1
      %p113 = por %p111, %p112
      %p114 = scmp.ne.s32.totalorder %s103, %s104
      %p115 = scmp.eq.s32.totalorder %s27, 0
      %p116 = por %p114, %p115
      %p117 = scmp.ne.s32.totalorder %s103, %s104
      %p118 = scmp.eq.s32.totalorder %s28, 1
      %p119 = por %p117, %p118
      %p121 = scmp.ne.s32.totalorder %s104, %s120
      %p122 = scmp.eq.s32.totalorder %s28, 0
      %p123 = por %p121, %p122
      %s124 = ssub.s32 %s29, %s41
      %p125 = scmp.eq.s32.totalorder %s124, 0
      %s127 = sadd.s32 %s126, 1
      %s128 = scalar_select %p125, %s126, %s127
      %p131 = pneg %p125
      %p132 = scmp.eq.s32.totalorder %s22, 1
      %p133 = por %p131, %p132
      %p134 = scmp.ne.s32.totalorder %s126, %s129
      %p135 = scmp.eq.s32.totalorder %s22, 0
      %p136 = por %p134, %p135
      %p137 = scmp.ne.s32.totalorder %s126, %s129
      %p138 = scmp.eq.s32.totalorder %s27, 1
      %p139 = por %p137, %p138
      %p140 = scmp.ne.s32.totalorder %s129, %s130
      %p141 = scmp.eq.s32.totalorder %s27, 0
      %p142 = por %p140, %p141
      %p143 = scmp.ne.s32.totalorder %s129, %s130
      %p144 = scmp.eq.s32.totalorder %s28, 1
      %p145 = por %p143, %p144
      %p147 = scmp.ne.s32.totalorder %s130, %s146
      %p148 = scmp.eq.s32.totalorder %s28, 0
      %p149 = por %p147, %p148
      %s150 = ssub.s32 %s29, %s41
      %p151 = scmp.eq.s32.totalorder %s150, 0
      %s153 = sadd.s32 %s152, 1
      %s154 = scalar_select %p151, %s152, %s153
      %p157 = pneg %p151
      %p158 = scmp.eq.s32.totalorder %s22, 1
      %p159 = por %p157, %p158
      %p160 = scmp.ne.s32.totalorder %s152, %s155
      %p161 = scmp.eq.s32.totalorder %s22, 0
      %p162 = por %p160, %p161
      %p163 = scmp.ne.s32.totalorder %s152, %s155
      %p164 = scmp.eq.s32.totalorder %s27, 1
      %p165 = por %p163, %p164
      %p166 = scmp.ne.s32.totalorder %s155, %s156
      %p167 = scmp.eq.s32.totalorder %s27, 0
      %p168 = por %p166, %p167
      %p169 = scmp.ne.s32.totalorder %s155, %s156
      %p170 = scmp.eq.s32.totalorder %s28, 1
      %p171 = por %p169, %p170
      %p173 = scmp.ne.s32.totalorder %s156, %s172
      %p174 = scmp.eq.s32.totalorder %s28, 0
      %p175 = por %p173, %p174
      %s176 = ssub.s32 %s29, %s41
      %s177 = ssub.s32 %s30, %s37
      %s178 = sor.u32 %s176, %s177
      %p179 = scmp.eq.s32.totalorder %s178, 0
      %s181 = sadd.s32 %s180, 1
      %s182 = scalar_select %p179, %s180, %s181
      %p185 = pneg %p179
      %p186 = scmp.eq.s32.totalorder %s22, 1
      %p187 = por %p185, %p186
      %p188 = scmp.ne.s32.totalorder %s180, %s183
      %p189 = scmp.eq.s32.totalorder %s22, 0
      %p190 = por %p188, %p189
      %p191 = scmp.ne.s32.totalorder %s180, %s183
      %p192 = scmp.eq.s32.totalorder %s27, 1
      %p193 = por %p191, %p192
      %p194 = scmp.ne.s32.totalorder %s183, %s184
      %p195 = scmp.eq.s32.totalorder %s27, 0
      %p196 = por %p194, %p195
      %p197 = scmp.ne.s32.totalorder %s183, %s184
      %p198 = scmp.eq.s32.totalorder %s28, 1
      %p199 = por %p197, %p198
      %p201 = scmp.ne.s32.totalorder %s184, %s200
      %p202 = scmp.eq.s32.totalorder %s28, 0
      %p203 = por %p201, %p202
      %s204 = ssub.s32 %s29, %s41
      %s205 = ssub.s32 %s30, %s37
      %s206 = sor.u32 %s204, %s205
      %p207 = scmp.eq.s32.totalorder %s206, 0
      %s209 = sadd.s32 %s208, 1
      %s210 = scalar_select %p207, %s208, %s209
      %p213 = pneg %p207
      %p214 = scmp.eq.s32.totalorder %s22, 1
      %p215 = por %p213, %p214
      %p216 = scmp.ne.s32.totalorder %s208, %s211
      %p217 = scmp.eq.s32.totalorder %s22, 0
      %p218 = por %p216, %p217
      %p219 = scmp.ne.s32.totalorder %s208, %s211
      %p220 = scmp.eq.s32.totalorder %s27, 1
      %p221 = por %p219, %p220
      %p222 = scmp.ne.s32.totalorder %s211, %s212
      %p223 = scmp.eq.s32.totalorder %s27, 0
      %p224 = por %p222, %p223
      %p225 = scmp.ne.s32.totalorder %s211, %s212
      %p226 = scmp.eq.s32.totalorder %s28, 1
      %p227 = por %p225, %p226
      %p229 = scmp.ne.s32.totalorder %s212, %s228
      %p230 = scmp.eq.s32.totalorder %s28, 0
      %p231 = por %p229, %p230
      %s232 = ssub.s32 %s29, %s41
      %s233 = ssub.s32 %s30, %s37
      %s234 = sor.u32 %s232, %s233
      %p235 = scmp.eq.s32.totalorder %s234, 0
      %s237 = sadd.s32 %s236, 1
      %s238 = scalar_select %p235, %s236, %s237
      %p241 = pneg %p235
      %p242 = scmp.eq.s32.totalorder %s22, 1
      %p243 = por %p241, %p242
      %p244 = scmp.ne.s32.totalorder %s236, %s239
      %p245 = scmp.eq.s32.totalorder %s22, 0
      %p246 = por %p244, %p245
      %p247 = scmp.ne.s32.totalorder %s236, %s239
      %p248 = scmp.eq.s32.totalorder %s27, 1
      %p249 = por %p247, %p248
      %p250 = scmp.ne.s32.totalorder %s239, %s240
      %p251 = scmp.eq.s32.totalorder %s27, 0
      %p252 = por %p250, %p251
      %p253 = scmp.ne.s32.totalorder %s239, %s240
      %p254 = scmp.eq.s32.totalorder %s28, 1
      %p255 = por %p253, %p254
      %p257 = scmp.ne.s32.totalorder %s240, %s256
      %p258 = scmp.eq.s32.totalorder %s28, 0
      %p259 = por %p257, %p258
      %s260 = ssub.s32 %s29, %s41
      %s261 = ssub.s32 %s30, %s37
      %s262 = sor.u32 %s260, %s261
      %p263 = scmp.eq.s32.totalorder %s262, 0
      %s265 = sadd.s32 %s264, 1
      %s266 = scalar_select %p263, %s264, %s265
      %p269 = pneg %p263
      %p270 = scmp.eq.s32.totalorder %s22, 1
      %p271 = por %p269, %p270
      %p272 = scmp.ne.s32.totalorder %s264, %s267
      %p273 = scmp.eq.s32.totalorder %s22, 0
      %p274 = por %p272, %p273
      %p275 = scmp.ne.s32.totalorder %s264, %s267
      %p276 = scmp.eq.s32.totalorder %s27, 1
      %p277 = por %p275, %p276
      %p278 = scmp.ne.s32.totalorder %s267, %s268
      %p279 = scmp.eq.s32.totalorder %s27, 0
      %p280 = por %p278, %p279
      %p281 = scmp.ne.s32.totalorder %s267, %s268
      %p282 = scmp.eq.s32.totalorder %s28, 1
      %p283 = por %p281, %p282
      %p285 = scmp.ne.s32.totalorder %s268, %s284
      %p286 = scmp.eq.s32.totalorder %s28, 0
      %p287 = por %p285, %p286
      %s288 = ssub.s32 %s29, %s41
      %s289 = ssub.s32 %s30, %s37
      %s290 = sor.u32 %s288, %s289
      %p291 = scmp.eq.s32.totalorder %s290, 0
      %s293 = sadd.s32 %s292, 1
      %s294 = scalar_select %p291, %s292, %s293
      %p297 = pneg %p291
      %p298 = scmp.eq.s32.totalorder %s22, 1
      %p299 = por %p297, %p298
      %p300 = scmp.ne.s32.totalorder %s292, %s295
      %p301 = scmp.eq.s32.totalorder %s22, 0
      %p302 = por %p300, %p301
      %p303 = scmp.ne.s32.totalorder %s292, %s295
      %p304 = scmp.eq.s32.totalorder %s27, 1
      %p305 = por %p303, %p304
      %p306 = scmp.ne.s32.totalorder %s295, %s296
      %p307 = scmp.eq.s32.totalorder %s27, 0
      %p308 = por %p306, %p307
      %p309 = scmp.ne.s32.totalorder %s295, %s296
      %p310 = scmp.eq.s32.totalorder %s28, 1
      %p311 = por %p309, %p310
      %p313 = scmp.ne.s32.totalorder %s296, %s312
      %p314 = scmp.eq.s32.totalorder %s28, 0
      %p315 = por %p313, %p314
      %p316 = scmp.le.s32.totalorder 1, %s22
      %p317 = scmp.lt.s32.totalorder %s22, 3
      %p318 = pnand %p316, %p317
      %p319 = pneg %p318
      // Predicated region
      $region9: #{tpu_custom_call.1} parent=5 // pred_check
        _
      $region10: #{tpu_custom_call.1} parent=5 // pred_check_branch
        %321 = sbr.rel (%p318) target = $region12
      $region11: #{tpu_custom_call.1} parent=5 // pred_region
        %s322 = ssub.s32 %s22, 1
        // Predicated region
        $region13: #{tpu_custom_call.1} parent=11 // pred_check
          %p323 = pneg %p116
        $region14: #{tpu_custom_call.1} parent=11 // pred_check_branch
          %325 = sbr.rel (%p323) target = $region16
        $region15: #{tpu_custom_call.1} parent=11 // pred_region
          %s326 = smul.u32 2, %s32
          %p327 = scmp.lt.s32.totalorder %s326, 1
          %s328 = scalar_select %p327, %s326, 1
          %s329 = smul.addr %s328, 2
          %s330 = scalar_lea.vmem %s2, %s329
          %s331 = smul.u32 2, %s32
        $region16: #{tpu_custom_call.1} parent=11 // pred_fallthru
          _
      $region12: #{tpu_custom_call.1} parent=5 // pred_fallthru
        _
      %p332 = scmp.lt.s32.totalorder %s22, 2
      // Predicated region
      $region17: #{tpu_custom_call.1} parent=5 // pred_check
        %p333 = pneg %p332
      $region18: #{tpu_custom_call.1} parent=5 // pred_check_branch
        %335 = sbr.rel (%p333) target = $region20
      $region19: #{tpu_custom_call.1} parent=5 // pred_region
        // Predicated region
        $region21: #{tpu_custom_call.1} parent=19 // pred_check
          %p336 = pneg %p56
        $region22: #{tpu_custom_call.1} parent=19 // pred_check_branch
          %338 = sbr.rel (%p336) target = $region24
        $region23: #{tpu_custom_call.1} parent=19 // pred_region
          %s339 = smul.u32 2, %s30
          %p340 = scmp.lt.s32.totalorder %s29, 1
          %s341 = scalar_select %p340, %s29, 1
          %p342 = scmp.lt.s32.totalorder %s339, 1
          %s343 = scalar_select %p342, %s339, 1
          %s344 = smul.addr %s341, 4
          %s345 = sadd.s32 %s343, %s344
          %s346 = smul.addr %s345, 8
          %s347 = scalar_lea.vmem %s0, %s346
          %s348 = smul.u32 2, %s30
        $region24: #{tpu_custom_call.1} parent=19 // pred_fallthru
          _
        // Predicated region
        $region25: #{tpu_custom_call.1} parent=19 // pred_check
          %p349 = pneg %p84
        $region26: #{tpu_custom_call.1} parent=19 // pred_check_branch
          %351 = sbr.rel (%p349) target = $region28
        $region27: #{tpu_custom_call.1} parent=19 // pred_region
          %s352 = smul.u32 2, %s30
          %p353 = scmp.lt.s32.totalorder %s29, 1
          %s354 = scalar_select %p353, %s29, 1
          %p355 = scmp.lt.s32.totalorder %s352, 1
          %s356 = scalar_select %p355, %s352, 1
          %s357 = smul.addr %s354, 2
          %s358 = sadd.s32 %s356, %s357
          %s359 = smul.addr %s358, 8
          %s360 = scalar_lea.vmem %s1, %s359
          %s361 = smul.u32 2, %s30
        $region28: #{tpu_custom_call.1} parent=19 // pred_fallthru
          _
        // Predicated region
        $region29: #{tpu_custom_call.1} parent=19 // pred_check
          %p362 = pneg %p136
        $region30: #{tpu_custom_call.1} parent=19 // pred_check_branch
          %364 = sbr.rel (%p362) target = $region32
        $region31: #{tpu_custom_call.1} parent=19 // pred_region
          %p365 = scmp.lt.s32.totalorder %s29, 1
          %s366 = scalar_select %p365, %s29, 1
          %s367 = smul.addr %s366, 8
          %s368 = scalar_lea.vmem %s3, %s367
        $region32: #{tpu_custom_call.1} parent=19 // pred_fallthru
          _
        // Predicated region
        $region33: #{tpu_custom_call.1} parent=19 // pred_check
          %p369 = pneg %p162
        $region34: #{tpu_custom_call.1} parent=19 // pred_check_branch
          %371 = sbr.rel (%p369) target = $region36
        $region35: #{tpu_custom_call.1} parent=19 // pred_region
          %p372 = scmp.lt.s32.totalorder %s29, 1
          %s373 = scalar_select %p372, %s29, 1
          %s374 = smul.addr %s373, 3
          %s375 = smul.addr %s374, 8
          %s376 = scalar_lea.vmem %s4, %s375
        $region36: #{tpu_custom_call.1} parent=19 // pred_fallthru
          _
      $region20: #{tpu_custom_call.1} parent=5 // pred_fallthru
        _
      %p377 = scmp.le.s32.totalorder 1, %s22
      %p378 = scmp.lt.s32.totalorder %s22, 3
      %p379 = pnand %p377, %p378
      %p380 = pneg %p379
      // Predicated region
      $region37: #{tpu_custom_call.1} parent=5 // pred_check
        _
      $region38: #{tpu_custom_call.1} parent=5 // pred_check_branch
        %382 = sbr.rel (%p379) target = $region40
      $region39: #{tpu_custom_call.1} parent=5 // pred_region
        %s383 = ssub.s32 %s22, 1
        %s384 = smul.u32 2, %s32
        %p385 = scmp.lt.s32.totalorder %s31, 1
        %s386 = scalar_select %p385, %s31, 1
        %p387 = scmp.lt.s32.totalorder %s384, 1
        %s388 = scalar_select %p387, %s384, 1
        %s389 = smul.addr %s386, 4
        %s390 = sadd.s32 %s388, %s389
        %s391 = smul.addr %s390, 8
        %s392 = scalar_lea.vmem %s0, %s391
        %p393 = pneg %p62
        %p394 = pneg %p59
        %s395 = smul.u32 2, %s32
        %p396 = scmp.lt.s32.totalorder %s31, 1
        %s397 = scalar_select %p396, %s31, 1
        %p398 = scmp.lt.s32.totalorder %s395, 1
        %s399 = scalar_select %p398, %s395, 1
        %s400 = smul.addr %s397, 2
        %s401 = sadd.s32 %s399, %s400
        %s402 = smul.addr %s401, 8
        %s403 = scalar_lea.vmem %s1, %s402
        %p404 = pneg %p90
        %p405 = pneg %p87
        %s406 = smul.u32 2, %s32
        %p407 = scmp.lt.s32.totalorder %s406, 1
        %s408 = scalar_select %p407, %s406, 1
        %s409 = smul.addr %s408, 2
        %s410 = scalar_lea.vmem %s2, %s409
        %p411 = pneg %p116
        %p412 = pneg %p113
        %p413 = scmp.lt.s32.totalorder %s31, 1
        %s414 = scalar_select %p413, %s31, 1
        %s415 = smul.addr %s414, 8
        %s416 = scalar_lea.vmem %s3, %s415
        %p417 = pneg %p142
        %p418 = pneg %p139
        %p419 = scmp.lt.s32.totalorder %s31, 1
        %s420 = scalar_select %p419, %s31, 1
        %s421 = smul.addr %s420, 3
        %s422 = smul.addr %s421, 8
        %s423 = scalar_lea.vmem %s4, %s422
        %p424 = pneg %p168
        %p425 = pneg %p165
        %p426 = pneg %p196
        %p427 = pneg %p193
        %s428 = smul.u32 2, %s32
        %p429 = scmp.lt.s32.totalorder %s31, 1
        %s430 = scalar_select %p429, %s31, 1
        %p431 = scmp.lt.s32.totalorder %s428, 1
        %s432 = scalar_select %p431, %s428, 1
        %s433 = smul.addr %s430, 6
        %s434 = sadd.s32 %s432, %s433
        %s435 = smul.addr %s434, 8
        %s436 = scalar_lea.vmem %s5, %s435
        %p437 = pneg %p224
        %p438 = pneg %p221
        %s439 = sand.u32 %s211, 1
        %s440 = scalar_lea.sflag [#allocation3], %s439
        %s441 = sand.u32 %s211, 1
        %s442 = smul.addr %s441, 2
        %s443 = scalar_lea.vmem [#allocation2], %s442
        %p444 = pneg %p252
        %p445 = pneg %p249
        %s446 = sand.u32 %s27, 1
        %s447 = scalar_lea.sflag [#allocation5], %s446
        %s448 = sand.u32 %s239, 1
        %s449 = smul.addr %s448, 2
        %s450 = scalar_lea.vmem [#allocation4], %s449
        %p451 = pneg %p280
        %p452 = pneg %p277
        %s453 = sand.u32 %s27, 1
        %s454 = scalar_lea.sflag [#allocation5], %s453
        %s455 = sand.u32 %s267, 1
        %s456 = smul.addr %s455, 2
        %s457 = scalar_lea.vmem [#allocation6], %s456
        %p458 = pneg %p308
        %p459 = pneg %p305
        %p460 = scmp.lt.s32.totalorder %s31, 1
        %s461 = scalar_select %p460, %s31, 1
        %p462 = scmp.lt.s32.totalorder %s32, 0
        %s463 = scalar_select %p462, %s32, 0
        %s464 = sadd.s32 %s463, %s461
        %s465 = smul.addr %s464, 8
        %s466 = scalar_lea.vmem %s9, %s465
        %s467 = smul.u32 2, %s32
        %p468 = scmp.lt.s32.totalorder %s31, 1
        %s469 = scalar_select %p468, %s31, 1
        %p470 = scmp.lt.s32.totalorder %s467, 1
        %s471 = scalar_select %p470, %s467, 1
        %s472 = smul.addr %s469, 4
        %s473 = sadd.s32 %s471, %s472
        %s474 = smul.addr %s473, 8
        %s475 = scalar_lea.vmem %s0, %s474
        %s476 = smul.u32 2, %s32
        %s477 = smul.u32 2, %s32
        %p478 = scmp.lt.s32.totalorder %s31, 1
        %s479 = scalar_select %p478, %s31, 1
        %p480 = scmp.lt.s32.totalorder %s477, 1
        %s481 = scalar_select %p480, %s477, 1
        %s482 = smul.addr %s479, 2
        %s483 = sadd.s32 %s481, %s482
        %s484 = smul.addr %s483, 8
        %s485 = scalar_lea.vmem %s1, %s484
        %s486 = smul.u32 2, %s32
        %s487 = smul.u32 2, %s32
        %p488 = scmp.lt.s32.totalorder %s487, 1
        %s489 = scalar_select %p488, %s487, 1
        %s490 = smul.addr %s489, 2
        %s491 = scalar_lea.vmem %s2, %s490
        %s492 = smul.u32 2, %s32
        %p493 = scmp.lt.s32.totalorder %s31, 1
        %s494 = scalar_select %p493, %s31, 1
        %s495 = smul.addr %s494, 8
        %s496 = scalar_lea.vmem %s3, %s495
        %p497 = scmp.lt.s32.totalorder %s31, 1
        %s498 = scalar_select %p497, %s31, 1
        %s499 = smul.addr %s498, 3
        %s500 = smul.addr %s499, 8
        %s501 = scalar_lea.vmem %s4, %s500
        %s502 = smul.u32 2, %s32
        %p503 = scmp.lt.s32.totalorder %s31, 1
        %s504 = scalar_select %p503, %s31, 1
        %p505 = scmp.lt.s32.totalorder %s502, 1
        %s506 = scalar_select %p505, %s502, 1
        %s507 = smul.addr %s504, 6
        %s508 = sadd.s32 %s506, %s507
        %s509 = smul.addr %s508, 8
        %s510 = scalar_lea.vmem %s5, %s509
        %s511 = smul.u32 2, %s32
        %s512 = smul.u32 2, %s32
        %s513 = smul.u32 2, %s32
        %s514 = smul.u32 2, %s32
        %p515 = scmp.lt.s32.totalorder %s31, 1
        %s516 = scalar_select %p515, %s31, 1
        %p517 = scmp.lt.s32.totalorder %s32, 0
        %s518 = scalar_select %p517, %s32, 0
        %s519 = sadd.s32 %s518, %s516
        %s520 = smul.addr %s519, 8
        %s521 = scalar_lea.vmem %s9, %s520
        %v522 = vld [vmem:[%s475] sm:$0xff]
        %v523 = vld [vmem:[%s475 + $0x8] sm:$0xff]
        %v524 = vld [vmem:[%s475 + $0x10] sm:$0xff]
        %v525 = vld [vmem:[%s475 + $0x18] sm:$0xff]
        %v526 = vld [vmem:[%s485] sm:$0x1f]
        %v527 = vld [vmem:[%s485 + $0x8] sm:$0x1f]
        %v528 = vld [vmem:[%s491] sm:$0xf]
        %v529 = vld [vmem:[%s496] sm:$0xff]
        %s530 = smul.u32 %s32, 256
        %v531 = vlaneseq
        %v532 = vand.u32 %v531, 127
        %v533 = vadd.s32 %v532, 128
        %v534 = vstv %s530
        %v535 = vadd.s32 %v532, %v534
        %v536 = vadd.s32 %v533, %v534
        %vm537 = vcmp.lt.s32.totalorder %v535, 256
        %vm538 = vcmp.lt.s32.totalorder %v536, 256
        %v540 = vlaneseq
        %v541 = vshrl.u32 %v540, 7
        %v542 = vsub.s32 0, %v541
        %v543 = vrot.slane %v528, %v542
        %v544 = vlaneseq
        %v545 = vshrl.u32 %v544, 7
        %v546 = vsub.s32 2, %v545
        %v547 = vrot.slane %v528, %v546
        %v550 = vlaneseq
        %v551 = vshrl.u32 %v550, 7
        %v552 = vsub.s32 0, %v551
        %v553 = vrot.slane %v543, %v552
        %v554 = vlaneseq
        %v555 = vshrl.u32 %v554, 7
        %v556 = vsub.s32 0, %v555
        %v557 = vrot.slane %v547, %v556
        %559 = vset.pattern.permute.xlu0 0
        %560 = vperm.xlu0 %559, %v529
        %v561 = vpop.permute.xlu0 %560
        %v563 = vsub.f32 %v553, %v561
        %v564 = vsub.f32 %v557, %v561
        %v565 = vlaneseq
        %v566 = vshrl.u32 %v565, 7
        %v567 = vsub.s32 1, %v566
        %v568 = vrot.slane %v528, %v567
        %v569 = vlaneseq
        %v570 = vshrl.u32 %v569, 7
        %v571 = vsub.s32 3, %v570
        %v572 = vrot.slane %v528, %v571
        %v575 = vlaneseq
        %v576 = vshrl.u32 %v575, 7
        %v577 = vsub.s32 1, %v576
        %v578 = vrot.slane %v568, %v577
        %v579 = vlaneseq
        %v580 = vshrl.u32 %v579, 7
        %v581 = vsub.s32 1, %v580
        %v582 = vrot.slane %v572, %v581
        %583 = vset.pattern.permute.xlu0 1
        %584 = vperm.xlu0 %583, %v529
        %v585 = vpop.permute.xlu0 %584
        %v587 = vsub.f32 %v578, %v585
        %v588 = vsub.f32 %v582, %v585
        %v589 = vmin.f32 %v563, %v587
        %v590 = vmin.f32 %v564, %v588
        %591 = vset.pattern.permute.xlu0 2
        %592 = vperm.xlu0 %591, %v529
        %v593 = vpop.permute.xlu0 %592
        %v595 = vsub.f32 %v593, %v553
        %v596 = vsub.f32 %v593, %v557
        %597 = vset.pattern.permute.xlu0 3
        %598 = vperm.xlu0 %597, %v529
        %v599 = vpop.permute.xlu0 %598
        %v601 = vsub.f32 %v599, %v578
        %v602 = vsub.f32 %v599, %v582
        %v603 = vmin.f32 %v595, %v601
        %v604 = vmin.f32 %v596, %v602
        %v605 = vmin.f32 %v589, %v603
        %v606 = vmin.f32 %v590, %v604
        %vm607 = vcmp.gt.f32.partialorder %v605, 1e-09
        %vm608 = vcmp.gt.f32.partialorder %v606, 1e-09
        %v609 = vsel %vm537, 1, 0
        %v610 = vsel %vm538, 1, 0
        %vm611 = vcmp.eq.s32.totalorder %v609, 1
        %vm612 = vcmp.eq.s32.totalorder %v610, 1
        %vm613 = vmand %vm607, %vm611
        %vm614 = vmand %vm608, %vm612
        %v615 = vsel %vm613, 1, 0
        %v616 = vsel %vm614, 1, 0
        %v617 = vcvt.s32.f32 %v615
        %v618 = vcvt.s32.f32 %v616
        %619 = vset.pattern.permute.xlu0 6
        %620 = vperm.xlu0 %619, %v529
        %v621 = vpop.permute.xlu0 %620
        %v623 = vmul.f32 %v617, %v621
        %v624 = vmul.f32 %v618, %v621
        %vm625 = vcmp.gt.f32.partialorder %v623, 0.0
        %vm626 = vcmp.gt.f32.partialorder %v624, 0.0
        %v627 = vcvt.f32.s32.to.zero.pseudo %v529
        %628 = vset.pattern.permute.xlu0 4
        %629 = vperm.xlu0 %628, %v627
        %v630 = vpop.permute.xlu0 %629
        %vm631 = vcmp.eq.s32.totalorder %v532, %v630
        %v632 = vsel %vm631, 1, 0
        %v633 = vcvt.s32.f32 %v632
        %vm634 = vcmask 130048
        %v636 = vsel %vm634, %v633, 0
        %638 = vmatprep.subr.mxu0 %v523
        %639 = vmatpush1.msra.mxu0 %v522
        %640 = vmatprep.subr.mxu0 %v525
        %641 = vmatpush1.msra.mxu0 %v524
        %642 = vmatprep.subr.mxu0 0.0
        %643 = vmatpush1.msra.mxu0 0.0
        %644 = vmatprep.subr.mxu0 0.0
        %645 = vmatpush1.msra.mxu0 0.0
        %646 = vmatprep.subr.mxu0 0.0
        %647 = vmatpush1.msra.mxu0 0.0
        %648 = vmatprep.subr.mxu0 0.0
        %649 = vmatpush1.msra.mxu0 0.0
        %650 = vmatprep.subr.mxu0 0.0
        %651 = vmatpush1.msra.mxu0 0.0
        %652 = vmatprep.subr.mxu0 0.0
        %653 = vmatpush1.msra.mxu0 0.0
        %654 = vmatprep.subr.mxu0 0.0
        %655 = vmatpush1.msra.mxu0 0.0
        %656 = vmatprep.subr.mxu0 0.0
        %657 = vmatpush1.msra.mxu0 0.0
        %658 = vmatprep.subr.mxu0 0.0
        %659 = vmatpush1.msra.mxu0 0.0
        %660 = vmatprep.subr.mxu0 0.0
        %661 = vmatpush1.msra.mxu0 0.0
        %662 = vmatprep.subr.mxu0 0.0
        %663 = vmatpush1.msra.mxu0 0.0
        %664 = vmatprep.subr.mxu0 0.0
        %665 = vmatpush1.msra.mxu0 0.0
        %666 = vmatprep.subr.mxu0 0.0
        %667 = vmatpush1.msra.mxu0 0.0
        %668 = vmatprep.subr.mxu0 0.0
        %669 = vmatpush1.msra.mxu0 0.0
        %670 = vmatprep.subr.mxu0 0.0
        %671 = vmatpush1.msra.mxu0 0.0
        %672 = vmatprep.subr.mxu0 0.0
        %673 = vmatpush1.msra.mxu0 0.0
        %674 = vmatprep.subr.mxu0 0.0
        %675 = vmatpush1.msra.mxu0 0.0
        %676 = vmatprep.subr.mxu0 0.0
        %677 = vmatpush1.msra.mxu0 0.0
        %678 = vmatprep.subr.mxu0 0.0
        %679 = vmatpush1.msra.mxu0 0.0
        %680 = vmatprep.subr.mxu0 0.0
        %681 = vmatpush1.msra.mxu0 0.0
        %682 = vmatprep.subr.mxu0 0.0
        %683 = vmatpush1.msra.mxu0 0.0
        %684 = vmatprep.subr.mxu0 0.0
        %685 = vmatpush1.msra.mxu0 0.0
        %686 = vmatprep.subr.mxu0 0.0
        %687 = vmatpush1.msra.mxu0 0.0
        %688 = vmatprep.subr.mxu0 0.0
        %689 = vmatpush1.msra.mxu0 0.0
        %690 = vmatprep.subr.mxu0 0.0
        %691 = vmatpush1.msra.mxu0 0.0
        %692 = vmatprep.subr.mxu0 0.0
        %693 = vmatpush1.msra.mxu0 0.0
        %694 = vmatprep.subr.mxu0 0.0
        %695 = vmatpush1.msra.mxu0 0.0
        %696 = vmatprep.subr.mxu0 0.0
        %697 = vmatpush1.msra.mxu0 0.0
        %698 = vmatprep.subr.mxu0 0.0
        %699 = vmatpush1.msra.mxu0 0.0
        %700 = vmatprep.subr.mxu0 0.0
        %701 = vmatpush1.msra.mxu0 0.0
        %702 = vmatprep.mubr.f32.mxu0 0.0
        %703 = vmatmul.mubr.f32.gmra.mrb[0].mxu0 %v636
        %v704 = vpop.f32.mrb[0].mxu0
        %v705 = vadd.f32 0.0, %v704
        %v706 = vpop.f32.mrb[0].mxu0
        %v707 = vadd.f32 0.0, %v706
        %708 = vdwg.mxu0
        %v709 = vsel %vm625, %v705, 0.0
        %v710 = vsel %vm626, %v707, 0.0
        %711 = vrot.lane.b32.xlu0 %v529, 2
        %v712 = vpop.permute.xlu0 %711
        %v714 = vsub.f32 %v529, %v712
        %v717 = vrot.slane %v526, 6
        %v718 = vrot.slane %v527, 6
        %v721 = vsub.f32 %v526, %v717
        %v722 = vsub.f32 %v527, %v718
        %v723 = vlaneseq
        %v724 = vshrl.u32 %v723, 7
        %v725 = vsub.s32 2, %v724
        %v726 = vrot.slane %v526, %v725
        %v727 = vlaneseq
        %v728 = vshrl.u32 %v727, 7
        %v729 = vsub.s32 2, %v728
        %v730 = vrot.slane %v527, %v729
        %v731 = vmin.f32 %v593, %v726
        %v732 = vmin.f32 %v593, %v730
        %v733 = vlaneseq
        %v734 = vshrl.u32 %v733, 7
        %v735 = vsub.s32 0, %v734
        %v736 = vrot.slane %v526, %v735
        %v737 = vlaneseq
        %v738 = vshrl.u32 %v737, 7
        %v739 = vsub.s32 0, %v738
        %v740 = vrot.slane %v527, %v739
        %v741 = vmax.f32 %v561, %v736
        %v742 = vmax.f32 %v561, %v740
        %v743 = vsub.f32 %v731, %v741
        %v744 = vsub.f32 %v732, %v742
        %v745 = vmax.f32 %v743, 0.0
        %v746 = vmax.f32 %v744, 0.0
        %v747 = vlaneseq
        %v748 = vshrl.u32 %v747, 7
        %v749 = vsub.s32 3, %v748
        %v750 = vrot.slane %v526, %v749
        %v751 = vlaneseq
        %v752 = vshrl.u32 %v751, 7
        %v753 = vsub.s32 3, %v752
        %v754 = vrot.slane %v527, %v753
        %v755 = vmin.f32 %v599, %v750
        %v756 = vmin.f32 %v599, %v754
        %v757 = vlaneseq
        %v758 = vshrl.u32 %v757, 7
        %v759 = vsub.s32 1, %v758
        %v760 = vrot.slane %v526, %v759
        %v761 = vlaneseq
        %v762 = vshrl.u32 %v761, 7
        %v763 = vsub.s32 1, %v762
        %v764 = vrot.slane %v527, %v763
        %v765 = vmax.f32 %v585, %v760
        %v766 = vmax.f32 %v585, %v764
        %v767 = vsub.f32 %v755, %v765
        %v768 = vsub.f32 %v756, %v766
        %v769 = vmax.f32 %v767, 0.0
        %v770 = vmax.f32 %v768, 0.0
        %v771 = vmul.f32 %v745, %v769
        %v772 = vmul.f32 %v746, %v770
        %774 = vrot.lane.b32.xlu0 %v714, 127
        %v775 = vpop.permute.xlu0 %774
        %v777 = vmul.f32 %v714, %v775
        %v780 = vrot.slane %v721, 1
        %v781 = vrot.slane %v722, 1
        %v784 = vmul.f32 %v721, %v780
        %v785 = vmul.f32 %v722, %v781
        %787 = vset.pattern.permute.xlu0 2
        %788 = vperm.xlu0 %787, %v777
        %v789 = vpop.permute.xlu0 %788
        %v791 = vlaneseq
        %v792 = vshrl.u32 %v791, 7
        %v793 = vsub.s32 2, %v792
        %v794 = vrot.slane %v784, %v793
        %v795 = vlaneseq
        %v796 = vshrl.u32 %v795, 7
        %v797 = vsub.s32 2, %v796
        %v798 = vrot.slane %v785, %v797
        %v799 = vadd.f32 %v789, %v794
        %v800 = vadd.f32 %v789, %v798
        %v801 = vsub.f32 %v799, %v771
        %v802 = vsub.f32 %v800, %v772
        %v803 = vadd.f32 %v801, 1e-07
        %v804 = vadd.f32 %v802, 1e-07
        %v805 = vrcp.pop %v803
        %v806 = vrcp.pop %v804
        %v807 = vmul.f32 %v771, %v805
        %v808 = vmul.f32 %v772, %v806
        %v809 = vmax.f32 %v593, %v726
        %v810 = vmax.f32 %v593, %v730
        %v811 = vmin.f32 %v561, %v736
        %v812 = vmin.f32 %v561, %v740
        %v813 = vsub.f32 %v809, %v811
        %v814 = vsub.f32 %v810, %v812
        %v815 = vmax.f32 %v599, %v750
        %v816 = vmax.f32 %v599, %v754
        %v817 = vmin.f32 %v585, %v760
        %v818 = vmin.f32 %v585, %v764
        %v819 = vsub.f32 %v815, %v817
        %v820 = vsub.f32 %v816, %v818
        %v821 = vmul.f32 %v813, %v813
        %v822 = vmul.f32 %v814, %v814
        %v823 = vmul.f32 %v819, %v819
        %v824 = vmul.f32 %v820, %v820
        %v825 = vadd.f32 %v821, %v823
        %v826 = vadd.f32 %v822, %v824
        %v827 = vadd.f32 %v825, 1e-07
        %v828 = vadd.f32 %v826, 1e-07
        %v829 = vrot.slane %v526, 2
        %v830 = vrot.slane %v527, 2
        %v833 = vadd.f32 %v526, %v829
        %v834 = vadd.f32 %v527, %v830
        %v835 = vlaneseq
        %v836 = vshrl.u32 %v835, 7
        %v837 = vsub.s32 0, %v836
        %v838 = vrot.slane %v833, %v837
        %v839 = vlaneseq
        %v840 = vshrl.u32 %v839, 7
        %v841 = vsub.s32 0, %v840
        %v842 = vrot.slane %v834, %v841
        %v843 = vsub.f32 %v838, %v561
        %v844 = vsub.f32 %v842, %v561
        %v845 = vsub.f32 %v843, %v593
        %v846 = vsub.f32 %v844, %v593
        %v847 = vlaneseq
        %v848 = vshrl.u32 %v847, 7
        %v849 = vsub.s32 1, %v848
        %v850 = vrot.slane %v833, %v849
        %v851 = vlaneseq
        %v852 = vshrl.u32 %v851, 7
        %v853 = vsub.s32 1, %v852
        %v854 = vrot.slane %v834, %v853
        %v855 = vsub.f32 %v850, %v585
        %v856 = vsub.f32 %v854, %v585
        %v857 = vsub.f32 %v855, %v599
        %v858 = vsub.f32 %v856, %v599
        %v859 = vmul.f32 %v845, %v845
        %v860 = vmul.f32 %v846, %v846
        %v861 = vmul.f32 %v857, %v857
        %v862 = vmul.f32 %v858, %v858
        %v863 = vadd.f32 %v859, %v861
        %v864 = vadd.f32 %v860, %v862
        %v865 = vmul.f32 %v863, 0.25
        %v866 = vmul.f32 %v864, 0.25
        %v867 = vlaneseq
        %v868 = vshrl.u32 %v867, 7
        %v869 = vsub.s32 4, %v868
        %v870 = vrot.slane %v526, %v869
        %v871 = vlaneseq
        %v872 = vshrl.u32 %v871, 7
        %v873 = vsub.s32 4, %v872
        %v874 = vrot.slane %v527, %v873
        %875 = vset.pattern.permute.xlu0 5
        %876 = vperm.xlu0 %875, %v529
        %v877 = vpop.permute.xlu0 %876
        %v879 = vsub.f32 %v870, %v877
        %v880 = vsub.f32 %v874, %v877
        %v881 = vmul.f32 %v879, 0.40528473
        %v882 = vmul.f32 %v880, 0.40528473
        %v883 = vmul.f32 %v881, %v879
        %v884 = vmul.f32 %v882, %v880
        %v885 = vsub.f32 %v883, %v807
        %v886 = vsub.f32 %v884, %v808
        %v887 = vadd.f32 %v885, 1.0000001
        %v888 = vadd.f32 %v886, 1.0000001
        %v889 = vrcp.pop %v887
        %v890 = vrcp.pop %v888
        %v891 = vmul.f32 %v883, %v889
        %v892 = vmul.f32 %v884, %v890
        %v893 = vrcp.pop %v827
        %v894 = vrcp.pop %v828
        %v895 = vmul.f32 %v865, %v893
        %v896 = vmul.f32 %v866, %v894
        %v897 = vmul.f32 %v883, %v891
        %v898 = vmul.f32 %v884, %v892
        %v899 = vadd.f32 %v895, %v897
        %v900 = vadd.f32 %v896, %v898
        %v901 = vsub.f32 %v807, %v899
        %v902 = vsub.f32 %v808, %v900
        %v903 = vmax.f32 %v901, 0.0
        %v904 = vmax.f32 %v902, 0.0
        %v905 = vsel %vm625, %v903, 0.0
        %v906 = vsel %vm626, %v904, 0.0
        %v907 = vmul.f32 %v905, %v905
        %v908 = vmul.f32 %v906, %v906
        %v909 = vmul.f32 %v907, %v907
        %v910 = vmul.f32 %v908, %v908
        %v911 = vmul.f32 %v907, %v909
        %v912 = vmul.f32 %v908, %v910
        %v913 = vmul.f32 %v709, %v911
        %v914 = vmul.f32 %v710, %v912
        %v915 = vcvt.s32.f32 %v535
        %v916 = vcvt.s32.f32 %v536
        %v917 = vadd.f32 %v915, 1.0
        %v918 = vadd.f32 %v916, 1.0
        %v919 = vsub.f32 0.0, %v917
        %v920 = vsub.f32 0.0, %v918
        %v921 = vmul.f32 %v919, 1e-30
        %v922 = vmul.f32 %v920, 1e-30
        %vm923 = vcmp.gt.f32.partialorder %v913, 0.0
        %vm924 = vcmp.gt.f32.partialorder %v914, 0.0
        %v925 = vsel %vm923, %v913, %v921
        %v926 = vsel %vm924, %v914, %v922
        %v927 = vmax.f32 %v925, %v926
        %928 = vmax.xlane.f32.xlu0 %v927
        %v929 = vpop.xlane.xlu0 %928
        %vm930 = vcmp.eq.f32.partialorder %v925, %v929
        %vm931 = vcmp.eq.f32.partialorder %v926, %v929
        %v932 = vsel %vm930, -inf, %v925
        %v933 = vsel %vm931, -inf, %v926
        %v934 = vmax.f32 %v932, %v933
        %935 = vmax.xlane.f32.xlu0 %v934
        %v936 = vpop.xlane.xlu0 %935
        %vm937 = vcmp.eq.f32.partialorder %v932, %v936
        %vm938 = vcmp.eq.f32.partialorder %v933, %v936
        %v939 = vsel %vm937, -inf, %v932
        %v940 = vsel %vm938, -inf, %v933
        %v941 = vmax.f32 %v939, %v940
        %942 = vmax.xlane.f32.xlu0 %v941
        %v943 = vpop.xlane.xlu0 %942
        %vm944 = vcmp.eq.f32.partialorder %v939, %v943
        %vm945 = vcmp.eq.f32.partialorder %v940, %v943
        %v946 = vsel %vm944, -inf, %v939
        %v947 = vsel %vm945, -inf, %v940
        %v948 = vmax.f32 %v946, %v947
        %949 = vmax.xlane.f32.xlu0 %v948
        %v950 = vpop.xlane.xlu0 %949
        %vm951 = vcmp.eq.f32.partialorder %v946, %v950
        %vm952 = vcmp.eq.f32.partialorder %v947, %v950
        %v953 = vsel %vm951, -inf, %v946
        %v954 = vsel %vm952, -inf, %v947
        %v955 = vmax.f32 %v953, %v954
        %956 = vmax.xlane.f32.xlu0 %v955
        %v957 = vpop.xlane.xlu0 %956
        %vm958 = vcmp.eq.f32.partialorder %v953, %v957
        %vm959 = vcmp.eq.f32.partialorder %v954, %v957
        %v960 = vsel %vm958, -inf, %v953
        %v961 = vsel %vm959, -inf, %v954
        %v962 = vmax.f32 %v960, %v961
        %963 = vmax.xlane.f32.xlu0 %v962
        %v964 = vpop.xlane.xlu0 %963
        %vm965 = vcmp.eq.f32.partialorder %v960, %v964
        %vm966 = vcmp.eq.f32.partialorder %v961, %v964
        %v967 = vsel %vm965, -inf, %v960
        %v968 = vsel %vm966, -inf, %v961
        %v969 = vmax.f32 %v967, %v968
        %970 = vmax.xlane.f32.xlu0 %v969
        %v971 = vpop.xlane.xlu0 %970
        %vm972 = vcmp.eq.f32.partialorder %v967, %v971
        %vm973 = vcmp.eq.f32.partialorder %v968, %v971
        %v974 = vsel %vm972, -inf, %v967
        %v975 = vsel %vm973, -inf, %v968
        %v976 = vmax.f32 %v974, %v975
        %977 = vmax.xlane.f32.xlu0 %v976
        %v978 = vpop.xlane.xlu0 %977
        %vm979 = vcmp.eq.f32.partialorder %v974, %v978
        %vm980 = vcmp.eq.f32.partialorder %v975, %v978
        %v981 = vsel %vm979, -inf, %v974
        %v982 = vsel %vm980, -inf, %v975
        %v983 = vmax.f32 %v981, %v982
        %984 = vmax.xlane.f32.xlu0 %v983
        %v985 = vpop.xlane.xlu0 %984
        %vm986 = vcmp.eq.f32.partialorder %v981, %v985
        %vm987 = vcmp.eq.f32.partialorder %v982, %v985
        %v988 = vsel %vm986, -inf, %v981
        %v989 = vsel %vm987, -inf, %v982
        %v990 = vmax.f32 %v988, %v989
        %991 = vmax.xlane.f32.xlu0 %v990
        %v992 = vpop.xlane.xlu0 %991
        %vm993 = vcmp.eq.f32.partialorder %v988, %v992
        %vm994 = vcmp.eq.f32.partialorder %v989, %v992
        %v995 = vsel %vm993, -inf, %v988
        %v996 = vsel %vm994, -inf, %v989
        %v997 = vmax.f32 %v995, %v996
        %998 = vmax.xlane.f32.xlu0 %v997
        %v999 = vpop.xlane.xlu0 %998
        %vm1000 = vcmp.eq.f32.partialorder %v995, %v999
        %vm1001 = vcmp.eq.f32.partialorder %v996, %v999
        %v1002 = vsel %vm1000, -inf, %v995
        %v1003 = vsel %vm1001, -inf, %v996
        %v1004 = vmax.f32 %v1002, %v1003
        %1005 = vmax.xlane.f32.xlu0 %v1004
        %v1006 = vpop.xlane.xlu0 %1005
        %vm1007 = vcmp.eq.f32.partialorder %v1002, %v1006
        %vm1008 = vcmp.eq.f32.partialorder %v1003, %v1006
        %v1009 = vsel %vm1007, -inf, %v1002
        %v1010 = vsel %vm1008, -inf, %v1003
        %v1011 = vmax.f32 %v1009, %v1010
        %1012 = vmax.xlane.f32.xlu0 %v1011
        %v1013 = vpop.xlane.xlu0 %1012
        %vm1014 = vcmp.ge.f32.partialorder %v925, %v1013
        %vm1015 = vcmp.ge.f32.partialorder %v926, %v1013
        %v1016 = vsel %vm1014, %v623, 0.0
        %v1017 = vsel %vm1015, %v624, 0.0
        %v1018 = vrot.slane %v1016, 4
        %v1019 = vadd.f32 %v1016, %v1018
        %v1020 = vrot.slane %v1019, 2
        %v1021 = vadd.f32 %v1019, %v1020
        %v1022 = vrot.slane %v1021, 1
        %v1023 = vadd.f32 %v1021, %v1022
        %v1024 = vrot.slane %v1017, 4
        %v1025 = vadd.f32 %v1017, %v1024
        %v1026 = vrot.slane %v1025, 2
        %v1027 = vadd.f32 %v1025, %v1026
        %v1028 = vrot.slane %v1027, 1
        %v1029 = vadd.f32 %v1027, %v1028
        %v1030 = vlaneseq
        %v1031 = vshrl.u32 %v1030, 7
        %v1032 = vrot.slane %v905, 4
        %v1033 = vmax.f32 %v905, %v1032
        %v1034 = vrot.slane %v1033, 2
        %v1035 = vmax.f32 %v1033, %v1034
        %v1036 = vrot.slane %v1035, 1
        %v1037 = vmax.f32 %v1035, %v1036
        %v1038 = vrot.slane %v906, 4
        %v1039 = vmax.f32 %v906, %v1038
        %v1040 = vrot.slane %v1039, 2
        %v1041 = vmax.f32 %v1039, %v1040
        %v1042 = vrot.slane %v1041, 1
        %v1043 = vmax.f32 %v1041, %v1042
        %vm1044 = vcmp.eq.f32.partialorder %v905, %v1037
        %vm1045 = vcmp.eq.f32.partialorder %v906, %v1043
        %v1046 = vsel %vm1044, %v1031, 8
        %v1047 = vsel %vm1045, %v1031, 8
        %v1048 = vrot.slane %v1046, 4
        %vm1049 = vcmp.lt.s32.totalorder %v1046, %v1048
        %v1050 = vsel %vm1049, %v1046, %v1048
        %v1051 = vrot.slane %v1050, 2
        %vm1052 = vcmp.lt.s32.totalorder %v1050, %v1051
        %v1053 = vsel %vm1052, %v1050, %v1051
        %v1054 = vrot.slane %v1053, 1
        %vm1055 = vcmp.lt.s32.totalorder %v1053, %v1054
        %v1056 = vsel %vm1055, %v1053, %v1054
        %v1057 = vrot.slane %v1047, 4
        %vm1058 = vcmp.lt.s32.totalorder %v1047, %v1057
        %v1059 = vsel %vm1058, %v1047, %v1057
        %v1060 = vrot.slane %v1059, 2
        %vm1061 = vcmp.lt.s32.totalorder %v1059, %v1060
        %v1062 = vsel %vm1061, %v1059, %v1060
        %v1063 = vrot.slane %v1062, 1
        %vm1064 = vcmp.lt.s32.totalorder %v1062, %v1063
        %v1065 = vsel %vm1064, %v1062, %v1063
        %vm1066 = vcmp.eq.s32.totalorder %v1031, %v1056
        %vm1067 = vcmp.eq.s32.totalorder %v1031, %v1065
        %v1068 = vsel %vm1066, 1, 0
        %v1069 = vsel %vm1067, 1, 0
        %v1070 = vcvt.s32.f32 %v1068
        %v1071 = vcvt.s32.f32 %v1069
        %vm1072 = vcmp.gt.f32.partialorder %v1023, 1.0
        %vm1073 = vcmp.gt.f32.partialorder %v1029, 1.0
        %v1074 = vsel %vm1072, 1, 0
        %v1075 = vsel %vm1073, 1, 0
        %vm1076 = vcmp.eq.s32.totalorder %v1074, 1
        %vm1077 = vcmp.eq.s32.totalorder %v1075, 1
        %v1078 = vsel %vm1076, %v1070, %v1016
        %v1079 = vsel %vm1077, %v1071, %v1017
        %vm1080 = vcmp.gt.f32.partialorder %v1023, 0.0
        %vm1081 = vcmp.gt.f32.partialorder %v1029, 0.0
        %v1082 = vcvt.s32.f32 %v1031
        %v1083 = vmul.f32 %v1082, %v1078
        %v1084 = vmul.f32 %v1082, %v1079
        %v1085 = vrot.slane %v1083, 4
        %v1086 = vadd.f32 %v1083, %v1085
        %v1087 = vrot.slane %v1086, 2
        %v1088 = vadd.f32 %v1086, %v1087
        %v1089 = vrot.slane %v1088, 1
        %v1090 = vadd.f32 %v1088, %v1089
        %v1091 = vrot.slane %v1084, 4
        %v1092 = vadd.f32 %v1084, %v1091
        %v1093 = vrot.slane %v1092, 2
        %v1094 = vadd.f32 %v1092, %v1093
        %v1095 = vrot.slane %v1094, 1
        %v1096 = vadd.f32 %v1094, %v1095
        %v1097 = vcvt.f32.s32.to.zero.pseudo %v1090
        %v1098 = vcvt.f32.s32.to.zero.pseudo %v1096
        %vm1099 = vcmp.eq.s32.totalorder %v1031, %v1097
        %vm1100 = vcmp.eq.s32.totalorder %v1031, %v1098
        %v1101 = vsel %vm1099, 1, 0
        %v1102 = vsel %vm1100, 1, 0
        %v1103 = vcvt.s32.f32 %v1101
        %v1104 = vcvt.s32.f32 %v1102
        %v1105 = vld [vmem:[%s501] sm:$0xff]
        %v1106 = vld [vmem:[%s501 + $0x8] sm:$0xff]
        %v1107 = vld [vmem:[%s501 + $0x10] sm:$0x1f]
        %vm1108 = vcmask 64512
        %v1110 = vsel %vm1108, %v1105, 0
        %v1113 = vsel %vm1108, %v1106, 0
        %v1116 = vsel %vm1108, %v1107, 0
        %1118 = vmatprep.subr.mxu0 %v1104
        %1119 = vmatpush1.msra.mxu0 %v1103
        %1120 = vmatprep.subr.mxu0 0.0
        %1121 = vmatpush1.msra.mxu0 0.0
        %1122 = vmatprep.subr.mxu0 0.0
        %1123 = vmatpush1.msra.mxu0 0.0
        %1124 = vmatprep.subr.mxu0 0.0
        %1125 = vmatpush1.msra.mxu0 0.0
        %1126 = vmatprep.subr.mxu0 0.0
        %1127 = vmatpush1.msra.mxu0 0.0
        %1128 = vmatprep.subr.mxu0 0.0
        %1129 = vmatpush1.msra.mxu0 0.0
        %1130 = vmatprep.subr.mxu0 0.0
        %1131 = vmatpush1.msra.mxu0 0.0
        %1132 = vmatprep.subr.mxu0 0.0
        %1133 = vmatpush1.msra.mxu0 0.0
        %1134 = vmatprep.subr.mxu0 0.0
        %1135 = vmatpush1.msra.mxu0 0.0
        %1136 = vmatprep.subr.mxu0 0.0
        %1137 = vmatpush1.msra.mxu0 0.0
        %1138 = vmatprep.subr.mxu0 0.0
        %1139 = vmatpush1.msra.mxu0 0.0
        %1140 = vmatprep.subr.mxu0 0.0
        %1141 = vmatpush1.msra.mxu0 0.0
        %1142 = vmatprep.subr.mxu0 0.0
        %1143 = vmatpush1.msra.mxu0 0.0
        %1144 = vmatprep.subr.mxu0 0.0
        %1145 = vmatpush1.msra.mxu0 0.0
        %1146 = vmatprep.subr.mxu0 0.0
        %1147 = vmatpush1.msra.mxu0 0.0
        %1148 = vmatprep.subr.mxu0 0.0
        %1149 = vmatpush1.msra.mxu0 0.0
        %1150 = vmatprep.subr.mxu0 0.0
        %1151 = vmatpush1.msra.mxu0 0.0
        %1152 = vmatprep.subr.mxu0 0.0
        %1153 = vmatpush1.msra.mxu0 0.0
        %1154 = vmatprep.subr.mxu0 0.0
        %1155 = vmatpush1.msra.mxu0 0.0
        %1156 = vmatprep.subr.mxu0 0.0
        %1157 = vmatpush1.msra.mxu0 0.0
        %1158 = vmatprep.subr.mxu0 0.0
        %1159 = vmatpush1.msra.mxu0 0.0
        %1160 = vmatprep.subr.mxu0 0.0
        %1161 = vmatpush1.msra.mxu0 0.0
        %1162 = vmatprep.subr.mxu0 0.0
        %1163 = vmatpush1.msra.mxu0 0.0
        %1164 = vmatprep.subr.mxu0 0.0
        %1165 = vmatpush1.msra.mxu0 0.0
        %1166 = vmatprep.subr.mxu0 0.0
        %1167 = vmatpush1.msra.mxu0 0.0
        %1168 = vmatprep.subr.mxu0 0.0
        %1169 = vmatpush1.msra.mxu0 0.0
        %1170 = vmatprep.subr.mxu0 0.0
        %1171 = vmatpush1.msra.mxu0 0.0
        %1172 = vmatprep.subr.mxu0 0.0
        %1173 = vmatpush1.msra.mxu0 0.0
        %1174 = vmatprep.subr.mxu0 0.0
        %1175 = vmatpush1.msra.mxu0 0.0
        %1176 = vmatprep.subr.mxu0 0.0
        %1177 = vmatpush1.msra.mxu0 0.0
        %1178 = vmatprep.subr.mxu0 0.0
        %1179 = vmatpush1.msra.mxu0 0.0
        %1180 = vmatprep.subr.mxu0 0.0
        %1181 = vmatpush1.msra.mxu0 0.0
        %1182 = vmatprep.mubr.f32.mxu0 0.0
        %1183 = vmatmul.mubr.f32.gmra.mrb[0].mxu0 %v1110
        %v1184 = vpop.f32.mrb[0].mxu0
        %v1185 = vadd.f32 0.0, %v1184
        %v1186 = vpop.f32.mrb[0].mxu0
        %v1187 = vadd.f32 0.0, %v1186
        %1188 = vmatprep.mubr.f32.mxu0 0.0
        %1189 = vmatmul.mubr.f32.gmra.mrb[0].mxu0 %v1113
        %v1190 = vpop.f32.mrb[0].mxu0
        %v1191 = vadd.f32 0.0, %v1190
        %v1192 = vpop.f32.mrb[0].mxu0
        %v1193 = vadd.f32 0.0, %v1192
        %1194 = vmatprep.mubr.f32.mxu0 0.0
        %1195 = vmatmul.mubr.f32.gmra.mrb[0].mxu0 %v1116
        %v1196 = vpop.f32.mrb[0].mxu0
        %v1197 = vadd.f32 0.0, %v1196
        %v1198 = vpop.f32.mrb[0].mxu0
        %v1199 = vadd.f32 0.0, %v1198
        %1200 = vdwg.mxu0
        %1201 = vst [vmem:[%s510] sm:$0xff] %v1185
        %1202 = vst [vmem:[%s510 + $0x8] sm:$0xff] %v1187
        %1203 = vst [vmem:[%s510 + $0x10] sm:$0xff] %v1191
        %1204 = vst [vmem:[%s510 + $0x18] sm:$0xff] %v1193
        %1205 = vst [vmem:[%s510 + $0x20] sm:$0x1f] %v1197
        %1206 = vst [vmem:[%s510 + $0x28] sm:$0x1f] %v1199
        %v1207 = vcombine.low %v1097, %v1098
        %v1209 = vunpack.c.l.s4 1966171168
        %v1210 = vunpack.c.0.s8 %v1209
        %v1211 = vlaneseq
        %v1212 = vshrl.u32 %v1211, 7
        %v1213 = vsub.s32 %v1210, %v1212
        %v1214 = vrot.slane %v1207, %v1213
        %v1216 = vunpack.c.l.s4 1966171168
        %v1217 = vunpack.c.0.s8 %v1216
        %v1218 = vlaneseq
        %v1219 = vshrl.u32 %v1218, 7
        %v1220 = vsub.s32 %v1217, %v1219
        %v1221 = vrot.slane %v1214, %v1220
        %v1222 = vlaneseq
        %vm1223 = vcmp.ge.s32.totalorder %v1222, 0
        %vm1224 = vcmp.lt.s32.totalorder %v1222, 256
        %vm1225 = vmand %vm1223, %vm1224
        %1226 = vst.msk [vmem:[%s443] sm:$0x3] %vm1225, %v1221
        %v1227 = vsel %vm1080, 1, 0
        %v1228 = vsel %vm1081, 1, 0
        %v1229 = vcombine.low %v1227, %v1228
        %v1231 = vunpack.c.l.s4 1966171168
        %v1232 = vunpack.c.0.s8 %v1231
        %v1233 = vlaneseq
        %v1234 = vshrl.u32 %v1233, 7
        %v1235 = vsub.s32 %v1232, %v1234
        %v1236 = vrot.slane %v1229, %v1235
        %v1238 = vunpack.c.l.s4 1966171168
        %v1239 = vunpack.c.0.s8 %v1238
        %v1240 = vlaneseq
        %v1241 = vshrl.u32 %v1240, 7
        %v1242 = vsub.s32 %v1239, %v1241
        %v1243 = vrot.slane %v1236, %v1242
        %1244 = vst.msk [vmem:[%s450] sm:$0x3] %vm1225, %v1243
        %v1245 = vmul.f32 %v913, %v1078
        %v1246 = vmul.f32 %v914, %v1079
        %v1247 = vrot.slane %v1245, 4
        %v1248 = vmax.f32 %v1245, %v1247
        %v1249 = vrot.slane %v1248, 2
        %v1250 = vmax.f32 %v1248, %v1249
        %v1251 = vrot.slane %v1250, 1
        %v1252 = vmax.f32 %v1250, %v1251
        %v1253 = vrot.slane %v1246, 4
        %v1254 = vmax.f32 %v1246, %v1253
        %v1255 = vrot.slane %v1254, 2
        %v1256 = vmax.f32 %v1254, %v1255
        %v1257 = vrot.slane %v1256, 1
        %v1258 = vmax.f32 %v1256, %v1257
        %v1261 = vcombine.low %v1252, %v1258
        %v1263 = vunpack.c.l.s4 1966171168
        %v1264 = vunpack.c.0.s8 %v1263
        %v1265 = vlaneseq
        %v1266 = vshrl.u32 %v1265, 7
        %v1267 = vsub.s32 %v1264, %v1266
        %v1268 = vrot.slane %v1261, %v1267
        %v1270 = vunpack.c.l.s4 1966171168
        %v1271 = vunpack.c.0.s8 %v1270
        %v1272 = vlaneseq
        %v1273 = vshrl.u32 %v1272, 7
        %v1274 = vsub.s32 %v1271, %v1273
        %v1275 = vrot.slane %v1268, %v1274
        %1277 = vst.msk [vmem:[%s457] sm:$0x3] %vm1225, %v1275
        %v1278 = vmax.f32 %v1245, %v1246
        %1279 = vmax.xlane.f32.xlu0 %v1278
        %v1280 = vpop.xlane.xlu0 %1279
        %vm1281 = vcmask 7168
        %1282 = vst.msk [vmem:[%s521] sm:$0xff] %vm1281, %v1280
        %v1283 = vmul.f32 %v905, %v1078
        %v1284 = vmul.f32 %v906, %v1079
        %v1285 = vmax.f32 %v1283, %v1284
        %1286 = vmax.xlane.f32.xlu0 %v1285
        %v1287 = vpop.xlane.xlu0 %1286
        %vm1288 = vcmask 15368
        %1289 = vst.msk [vmem:[%s521] sm:$0xff] %vm1288, %v1287
        %s1290 = smul.u32 2, %s32
        %p1291 = scmp.lt.s32.totalorder %s31, 1
        %s1292 = scalar_select %p1291, %s31, 1
        %p1293 = scmp.lt.s32.totalorder %s1290, 1
        %s1294 = scalar_select %p1293, %s1290, 1
        %s1295 = smul.addr %s1292, 6
        %s1296 = sadd.s32 %s1294, %s1295
        %s1297 = smul.addr %s1296, 8
        %s1298 = scalar_lea.vmem %s5, %s1297
        %s1299 = sand.u32 %s211, 1
        %s1300 = scalar_lea.sflag [#allocation3], %s1299
        %s1301 = sand.u32 %s211, 1
        %s1302 = smul.addr %s1301, 2
        %s1303 = scalar_lea.vmem [#allocation2], %s1302
        %s1304 = sand.u32 %s27, 1
        %s1305 = scalar_lea.sflag [#allocation5], %s1304
        %s1306 = sand.u32 %s239, 1
        %s1307 = smul.addr %s1306, 2
        %s1308 = scalar_lea.vmem [#allocation4], %s1307
        %s1309 = sand.u32 %s27, 1
        %s1310 = scalar_lea.sflag [#allocation5], %s1309
        %s1311 = sand.u32 %s267, 1
        %s1312 = smul.addr %s1311, 2
        %s1313 = scalar_lea.vmem [#allocation6], %s1312
        %p1314 = scmp.lt.s32.totalorder %s31, 1
        %s1315 = scalar_select %p1314, %s31, 1
        %p1316 = scmp.lt.s32.totalorder %s32, 0
        %s1317 = scalar_select %p1316, %s32, 0
        %s1318 = sadd.s32 %s1317, %s1315
        %s1319 = smul.addr %s1318, 8
        %s1320 = scalar_lea.vmem %s9, %s1319
        // Predicated region
        $region41: #{tpu_custom_call.1} parent=39 // pred_check
          %p1321 = pneg %p193
        $region42: #{tpu_custom_call.1} parent=39 // pred_check_branch
          %1323 = sbr.rel (%p1321) target = $region44
        $region43: #{tpu_custom_call.1} parent=39 // pred_region
          %s1324 = smul.u32 2, %s32
        $region44: #{tpu_custom_call.1} parent=39 // pred_fallthru
          _
        // Predicated region
        $region45: #{tpu_custom_call.1} parent=39 // pred_check
          %p1325 = pneg %p221
        $region46: #{tpu_custom_call.1} parent=39 // pred_check_branch
          %1327 = sbr.rel (%p1325) target = $region48
        $region47: #{tpu_custom_call.1} parent=39 // pred_region
          %s1328 = smul.u32 2, %s32
          %s1330 = ssub.s32 32, 32
          %1331 = vsyncadd %s1300, %s1330
          %s1332 = smul.addr %s31, 2
          %s1333 = sadd.s32 %s1328, %s1332
          %s1334 = smul.addr %s1333, 16
          %s1335 = scalar_lea.hbm %s6, %s1334
          %s1337 = sshll.u32 %s1303, 4
          %s1338 = int_to_ptr.vmem [resolvable:$true] %s1337
          %1340 = dma.vmem_to_hbm [thread:$0]  %s1338, 32, %s1335, %s1300
        $region48: #{tpu_custom_call.1} parent=39 // pred_fallthru
          _
        // Predicated region
        $region49: #{tpu_custom_call.1} parent=39 // pred_check
          %p1341 = pneg %p249
        $region50: #{tpu_custom_call.1} parent=39 // pred_check_branch
          %1343 = sbr.rel (%p1341) target = $region52
        $region51: #{tpu_custom_call.1} parent=39 // pred_region
          %s1344 = smul.u32 2, %s32
          %s1346 = ssub.s32 32, 32
          %1347 = vsyncadd %s1305, %s1346
          %s1348 = smul.addr %s31, 2
          %s1349 = sadd.s32 %s1344, %s1348
          %s1350 = smul.addr %s1349, 16
          %s1351 = scalar_lea.hbm %s7, %s1350
          %s1353 = sshll.u32 %s1308, 4
          %s1354 = int_to_ptr.vmem [resolvable:$true] %s1353
          %1356 = dma.vmem_to_hbm [thread:$0]  %s1354, 32, %s1351, %s1305
        $region52: #{tpu_custom_call.1} parent=39 // pred_fallthru
          _
        // Predicated region
        $region53: #{tpu_custom_call.1} parent=39 // pred_check
          %p1357 = pneg %p277
        $region54: #{tpu_custom_call.1} parent=39 // pred_check_branch
          %1359 = sbr.rel (%p1357) target = $region56
        $region55: #{tpu_custom_call.1} parent=39 // pred_region
          %s1360 = smul.u32 2, %s32
          %s1362 = ssub.s32 32, 32
          %1363 = vsyncadd %s1310, %s1362
          %s1364 = smul.addr %s31, 2
          %s1365 = sadd.s32 %s1360, %s1364
          %s1366 = smul.addr %s1365, 16
          %s1367 = scalar_lea.hbm %s8, %s1366
          %s1369 = sshll.u32 %s1313, 4
          %s1370 = int_to_ptr.vmem [resolvable:$true] %s1369
          %1372 = dma.vmem_to_hbm [thread:$0]  %s1370, 32, %s1367, %s1310
        $region56: #{tpu_custom_call.1} parent=39 // pred_fallthru
          _
        // Predicated region
        $region57: #{tpu_custom_call.1} parent=39 // pred_check
          %p1373 = pneg %p305
        $region58: #{tpu_custom_call.1} parent=39 // pred_check_branch
          %1375 = sbr.rel (%p1373) target = $region60
        $region59: #{tpu_custom_call.1} parent=39 // pred_region
          _
        $region60: #{tpu_custom_call.1} parent=39 // pred_fallthru
          _
      $region40: #{tpu_custom_call.1} parent=5 // pred_fallthru
        _
      %p1376 = scmp.le.s32.totalorder 2, %s22
      // Predicated region
      $region61: #{tpu_custom_call.1} parent=5 // pred_check
        %p1377 = pneg %p1376
      $region62: #{tpu_custom_call.1} parent=5 // pred_check_branch
        %1379 = sbr.rel (%p1377) target = $region64
      $region63: #{tpu_custom_call.1} parent=5 // pred_region
        %s1380 = ssub.s32 %s22, 2
        // Predicated region
        $region65: #{tpu_custom_call.1} parent=63 // pred_check
          %p1381 = pneg %p199
        $region66: #{tpu_custom_call.1} parent=63 // pred_check_branch
          %1383 = sbr.rel (%p1381) target = $region68
        $region67: #{tpu_custom_call.1} parent=63 // pred_region
          %s1384 = smul.u32 2, %s34
          %p1385 = scmp.lt.s32.totalorder %s33, 1
          %s1386 = scalar_select %p1385, %s33, 1
          %p1387 = scmp.lt.s32.totalorder %s1384, 1
          %s1388 = scalar_select %p1387, %s1384, 1
          %s1389 = smul.addr %s1386, 6
          %s1390 = sadd.s32 %s1388, %s1389
          %s1391 = smul.addr %s1390, 8
          %s1392 = scalar_lea.vmem %s5, %s1391
        $region68: #{tpu_custom_call.1} parent=63 // pred_fallthru
          _
        // Predicated region
        $region69: #{tpu_custom_call.1} parent=63 // pred_check
          %p1393 = pneg %p227
        $region70: #{tpu_custom_call.1} parent=63 // pred_check_branch
          %1395 = sbr.rel (%p1393) target = $region72
        $region71: #{tpu_custom_call.1} parent=63 // pred_region
          %s1396 = sand.u32 %s212, 1
          %s1397 = scalar_lea.sflag [#allocation3], %s1396
          %s1398 = sand.u32 %s212, 1
          %s1399 = smul.addr %s1398, 2
          %s1400 = scalar_lea.vmem [#allocation2], %s1399
          %1401 = dma.done %s1397, 32
        $region72: #{tpu_custom_call.1} parent=63 // pred_fallthru
          _
        // Predicated region
        $region73: #{tpu_custom_call.1} parent=63 // pred_check
          %p1402 = pneg %p255
        $region74: #{tpu_custom_call.1} parent=63 // pred_check_branch
          %1404 = sbr.rel (%p1402) target = $region76
        $region75: #{tpu_custom_call.1} parent=63 // pred_region
          %s1405 = sand.u32 %s28, 1
          %s1406 = scalar_lea.sflag [#allocation5], %s1405
          %s1407 = sand.u32 %s240, 1
          %s1408 = smul.addr %s1407, 2
          %s1409 = scalar_lea.vmem [#allocation4], %s1408
          %1410 = dma.done %s1406, 32
        $region76: #{tpu_custom_call.1} parent=63 // pred_fallthru
          _
        // Predicated region
        $region77: #{tpu_custom_call.1} parent=63 // pred_check
          %p1411 = pneg %p283
        $region78: #{tpu_custom_call.1} parent=63 // pred_check_branch
          %1413 = sbr.rel (%p1411) target = $region80
        $region79: #{tpu_custom_call.1} parent=63 // pred_region
          %s1414 = sand.u32 %s28, 1
          %s1415 = scalar_lea.sflag [#allocation5], %s1414
          %s1416 = sand.u32 %s268, 1
          %s1417 = smul.addr %s1416, 2
          %s1418 = scalar_lea.vmem [#allocation6], %s1417
          %1419 = dma.done %s1415, 32
        $region80: #{tpu_custom_call.1} parent=63 // pred_fallthru
          _
        // Predicated region
        $region81: #{tpu_custom_call.1} parent=63 // pred_check
          %p1420 = pneg %p311
        $region82: #{tpu_custom_call.1} parent=63 // pred_check_branch
          %1422 = sbr.rel (%p1420) target = $region84
        $region83: #{tpu_custom_call.1} parent=63 // pred_region
          %p1423 = scmp.lt.s32.totalorder %s33, 1
          %s1424 = scalar_select %p1423, %s33, 1
          %p1425 = scmp.lt.s32.totalorder %s34, 0
          %s1426 = scalar_select %p1425, %s34, 0
          %s1427 = sadd.s32 %s1426, %s1424
          %s1428 = smul.addr %s1427, 8
          %s1429 = scalar_lea.vmem %s9, %s1428
        $region84: #{tpu_custom_call.1} parent=63 // pred_fallthru
          _
      $region64: #{tpu_custom_call.1} parent=5 // pred_fallthru
        _
    $region6: #{tpu_custom_call.1} parent=1 // loop_footer
      %s26 = sadd.s32 1, %s22
    $region7: #{tpu_custom_call.1} parent=1 // loop_footer_branch
      %21 = sbr.rel target = $region3
    $region8: #{tpu_custom_call.1} parent=1 // loop_exit
      _
    %1430 = vsyncpa [#allocation3], 1
    %s1431 = scalar_lea.sflag [#allocation3], 1
    %1432 = vsyncpa %s1431, 1
    %1433 = vsyncpa [#allocation5], 1
    %s1434 = scalar_lea.sflag [#allocation5], 1
    %1435 = vsyncpa %s1434, 1

</llo_original>
